<compile_context>
chip_gen: v7x
topology: tpu7x:2x2x1
jax: 0.10.0
libtpu: 0.0.40
codegen_flags: <defaults>
</compile_context>

<pallas_src>
import functools

import jax
import jax.numpy as jnp
from jax.experimental import pallas as pl
from jax.experimental.pallas import tpu as pltpu


def _round_up(x, m):
    return ((x + m - 1) // m) * m


def _gru_block_kernel(
    x_ref,        # (Tt, Bp, Ip)  block of Tt timesteps
    h0_ref,       # (Bp, Hp)      initial hidden (padded)
    wih_ref,      # (Ip, 3*Hp)    input->gates, gate-aligned columns (r,z,n)
    whh_ref,      # (Hp, 3*Hp)    hidden->gates
    bih_ref,      # (1, 3*Hp)
    bhh_ref,      # (1, 3*Hp)
    fcw_ref,      # (Hp, Op)
    fcb_ref,      # (1, Op)       padded class slots hold a large negative value
    out_ref,      # (Bp, Op)      log-softmax output (lane-dense)
    hout_ref,     # (Bp, Hp)      final hidden
    h_scratch,    # VMEM (Bp, Hp)        running hidden state (f32)
    gi_scratch,   # VMEM (Tt*Bp, 3*Hp)   staged input projection for this block
    *,
    seq_len,      # true (unpadded) sequence length T
):
    tb = pl.program_id(0)
    Tt, Bp, Ip = x_ref.shape
    Hp = whh_ref.shape[0]

    @pl.when(tb == 0)
    def _():
        h_scratch[...] = h0_ref[...].astype(jnp.float32)

    # --- batched input projection for the whole time block (one big matmul) ---
    x_blk = x_ref[...].reshape(Tt * Bp, Ip).astype(jnp.float32)
    gi_scratch[...] = (
        jnp.dot(x_blk, wih_ref[...], preferred_element_type=jnp.float32)
        + bih_ref[...]
    )

    # --- serial recurrence over the Tt timesteps of this block (unrolled) ---
    h = h_scratch[...]                                   # (Bp, Hp) f32
    for i in range(Tt):
        gi = gi_scratch[i * Bp:(i + 1) * Bp, :]          # static, sublane-aligned
        gh = (jnp.dot(h, whh_ref[...], preferred_element_type=jnp.float32)
              + bhh_ref[...])                            # (Bp, 3*Hp)
        # lane-aligned gate slices (Hp is a multiple of 128)
        r = jax.nn.sigmoid(gi[:, 0 * Hp:1 * Hp] + gh[:, 0 * Hp:1 * Hp])
        z = jax.nn.sigmoid(gi[:, 1 * Hp:2 * Hp] + gh[:, 1 * Hp:2 * Hp])
        n = jnp.tanh(gi[:, 2 * Hp:3 * Hp] + r * gh[:, 2 * Hp:3 * Hp])
        h_new = (1.0 - z) * n + z * h
        if seq_len % Tt != 0:
            # mask padded timesteps so they leave the hidden state untouched
            t_global = tb * Tt + i
            h = jnp.where(t_global < seq_len, h_new, h)
        else:
            h = h_new
    h_scratch[...] = h

    # --- epilogue: fc + log-softmax on the last grid step ---
    @pl.when(tb == pl.num_programs(0) - 1)
    def _():
        hout_ref[...] = h.astype(hout_ref.dtype)
        logits = (jnp.dot(h, fcw_ref[...], preferred_element_type=jnp.float32)
                  + fcb_ref[...])
        m = jnp.max(logits, axis=1, keepdims=True)
        shifted = logits - m
        lse = jnp.log(jnp.sum(jnp.exp(shifted), axis=1, keepdims=True))
        out_ref[...] = (shifted - lse).astype(out_ref.dtype)


@functools.partial(jax.jit, static_argnames=("time_block",))
def name_classifier_gru_forward(x, h0, params, *, time_block=16):
    """x: (T, B, I) f32, h0: (1, B, H) f32. Returns (log_probs (B, O), hidden (1, B, H))."""
    T, B, I = x.shape
    H = h0.shape[-1]
    O = params["fc_weight"].shape[0]

    # TPU-friendly padded shapes.
    Bp = _round_up(B, 8)        # sublanes
    Ip = _round_up(I, 128)      # lanes
    Hp = _round_up(H, 128)      # lanes (gate-aligned)
    Op = _round_up(O, 128)      # lane-dense output
    Tt = min(time_block, T)     # timesteps per grid step
    Tp = _round_up(T, Tt)
    n_blocks = Tp // Tt

    # --- pack weights: gate-aligned (in, 3*Hp) layout, zero padding ---
    wih = params["weight_ih"].astype(jnp.float32)        # (3H, I)
    whh = params["weight_hh"].astype(jnp.float32)        # (3H, H)
    bih = params["bias_ih"].astype(jnp.float32)          # (3H,)
    bhh = params["bias_hh"].astype(jnp.float32)          # (3H,)

    wih_t = jnp.zeros((Ip, 3 * Hp), jnp.float32)
    whh_t = jnp.zeros((Hp, 3 * Hp), jnp.float32)
    bih_p = jnp.zeros((1, 3 * Hp), jnp.float32)
    bhh_p = jnp.zeros((1, 3 * Hp), jnp.float32)
    for g in range(3):  # gate order: r, z, n
        wih_t = wih_t.at[:I, g * Hp:g * Hp + H].set(wih[g * H:(g + 1) * H, :].T)
        whh_t = whh_t.at[:H, g * Hp:g * Hp + H].set(whh[g * H:(g + 1) * H, :].T)
        bih_p = bih_p.at[:, g * Hp:g * Hp + H].set(bih[g * H:(g + 1) * H][None, :])
        bhh_p = bhh_p.at[:, g * Hp:g * Hp + H].set(bhh[g * H:(g + 1) * H][None, :])

    fcw_t = jnp.zeros((Hp, Op), jnp.float32).at[:H, :O].set(
        params["fc_weight"].astype(jnp.float32).T)
    # Padded class slots get a large negative bias so they vanish in log-softmax.
    fcb_p = jnp.full((1, Op), -1e30, jnp.float32).at[:, :O].set(
        params["fc_bias"].astype(jnp.float32)[None, :])

    # --- pad activations (zero padding keeps real rows/cols exact) ---
    x_p = jnp.zeros((Tp, Bp, Ip), jnp.float32).at[:T, :B, :I].set(
        x.astype(jnp.float32))
    h0_p = jnp.zeros((Bp, Hp), jnp.float32).at[:B, :H].set(
        h0[0].astype(jnp.float32))

    kernel = functools.partial(_gru_block_kernel, seq_len=T)

    grid_spec = pltpu.PrefetchScalarGridSpec(
        num_scalar_prefetch=0,
        grid=(n_blocks,),
        in_specs=[
            pl.BlockSpec((Tt, Bp, Ip), lambda tb: (tb, 0, 0)),   # x time-block
            pl.BlockSpec((Bp, Hp), lambda tb: (0, 0)),           # h0
            pl.BlockSpec((Ip, 3 * Hp), lambda tb: (0, 0)),       # W_ih (packed)
            pl.BlockSpec((Hp, 3 * Hp), lambda tb: (0, 0)),       # W_hh (packed)
            pl.BlockSpec((1, 3 * Hp), lambda tb: (0, 0)),        # b_ih
            pl.BlockSpec((1, 3 * Hp), lambda tb: (0, 0)),        # b_hh
            pl.BlockSpec((Hp, Op), lambda tb: (0, 0)),           # fc weight
            pl.BlockSpec((1, Op), lambda tb: (0, 0)),            # fc bias
        ],
        out_specs=[
            pl.BlockSpec((Bp, Op), lambda tb: (0, 0)),           # log-probs
            pl.BlockSpec((Bp, Hp), lambda tb: (0, 0)),           # final hidden
        ],
        scratch_shapes=[
            pltpu.VMEM((Bp, Hp), jnp.float32),                   # running hidden
            pltpu.VMEM((Tt * Bp, 3 * Hp), jnp.float32),          # staged gi block
        ],
    )

    out_p, hout_p = pl.pallas_call(
        kernel,
        out_shape=(
            jax.ShapeDtypeStruct((Bp, Op), jnp.float32),
            jax.ShapeDtypeStruct((Bp, Hp), jnp.float32),
        ),
        grid_spec=grid_spec,
        compiler_params=pltpu.CompilerParams(
            dimension_semantics=("arbitrary",),   # time axis is a true recurrence
        ),
    )(x_p, h0_p, wih_t, whh_t, bih_p, bhh_p, fcw_t, fcb_p)

    log_probs = out_p[:B, :O]
    hidden = hout_p[:B, :H][None]
    return log_probs, hidden


def init_params(key, input_size, hidden_size, output_size):
    """Deterministic uniform init mirroring PyTorch's default (+/- 1/sqrt(hidden))."""
    ks = jax.random.split(key, 6)
    bound = 1.0 / jnp.sqrt(hidden_size)
    u = lambda k, shape: jax.random.uniform(k, shape, jnp.float32, -bound, bound)
    return {
        "weight_ih": u(ks[0], (3 * hidden_size, input_size)),
        "weight_hh": u(ks[1], (3 * hidden_size, hidden_size)),
        "bias_ih": u(ks[2], (3 * hidden_size,)),
        "bias_hh": u(ks[3], (3 * hidden_size,)),
        "fc_weight": u(ks[4], (output_size, hidden_size)),
        "fc_bias": u(ks[5], (output_size,)),
    }


def _reference_forward(x, h0, params):
    """Pure-JAX reference of the PyTorch module, for a sanity check."""
    H = h0.shape[-1]
    wih, whh = params["weight_ih"], params["weight_hh"]
    bih, bhh = params["bias_ih"], params["bias_hh"]

    def step(h, x_t):
        gi = x_t @ wih.T + bih
        gh = h @ whh.T + bhh
        r = jax.nn.sigmoid(gi[:, :H] + gh[:, :H])
        z = jax.nn.sigmoid(gi[:, H:2 * H] + gh[:, H:2 * H])
        n = jnp.tanh(gi[:, 2 * H:] + r * gh[:, 2 * H:])
        h_new = (1 - z) * n + z * h
        return h_new, h_new

    h_final, _ = jax.lax.scan(step, h0[0], x)
    logits = h_final @ params["fc_weight"].T + params["fc_bias"]
    return jax.nn.log_softmax(logits, axis=1), h_final[None]


if __name__ == "__main__":
    seq_len, batch, input_size, hidden_size, output_size = 8, 2, 16, 32, 8

    key = jax.random.PRNGKey(0)
    k_x, k_p = jax.random.split(key)
    x = jax.random.normal(k_x, (seq_len, batch, input_size), jnp.float32)
    h0 = jnp.zeros((1, batch, hidden_size), jnp.float32)   # init_hidden
    params = init_params(k_p, input_size, hidden_size, output_size)

    log_probs, hidden = name_classifier_gru_forward(x, h0, params)
    jax.block_until_ready((log_probs, hidden))

    ref_lp, ref_h = _reference_forward(x, h0, params)
    assert log_probs.shape == (batch, output_size)
    assert hidden.shape == (1, batch, hidden_size)
    assert jnp.allclose(log_probs, ref_lp, atol=1e-5), "log-softmax mismatch"
    assert jnp.allclose(hidden, ref_h, atol=1e-5), "hidden mismatch"

    print("KERNEL_OK")
</pallas_src>

<mosaic_0001>
module attributes {stable_mosaic.version = 11 : i64} {
  func.func @_gru_block_kernel(%arg0: i32, %arg1: memref<8x8x128xf32, #tpu.memory_space<vmem>>, %arg2: memref<8x128xf32, #tpu.memory_space<vmem>>, %arg3: memref<128x384xf32, #tpu.memory_space<vmem>>, %arg4: memref<128x384xf32, #tpu.memory_space<vmem>>, %arg5: memref<1x384xf32, #tpu.memory_space<vmem>>, %arg6: memref<1x384xf32, #tpu.memory_space<vmem>>, %arg7: memref<128x128xf32, #tpu.memory_space<vmem>>, %arg8: memref<1x128xf32, #tpu.memory_space<vmem>>, %arg9: memref<8x128xf32, #tpu.memory_space<vmem>>, %arg10: memref<8x128xf32, #tpu.memory_space<vmem>>, %arg11: memref<8x128xf32, #tpu.memory_space<vmem>>, %arg12: memref<64x384xf32, #tpu.memory_space<vmem>>) attributes {dimension_semantics = [#tpu.dimension_semantics<arbitrary>], iteration_bounds = array<i64: 1>, scalar_prefetch = 0 : i64, scratch_operands = 2 : i64, tpu.core_type = #tpu.core_type<tc>, window_params = [{transform_indices = @transform_0, window_bounds = array<i64: 8, 8, 128>}, {pipeline_mode = #tpu.pipeline_mode<synchronous>, transform_indices = @transform_1, window_bounds = array<i64: 8, 128>}, {pipeline_mode = #tpu.pipeline_mode<synchronous>, transform_indices = @transform_2, window_bounds = array<i64: 128, 384>}, {pipeline_mode = #tpu.pipeline_mode<synchronous>, transform_indices = @transform_3, window_bounds = array<i64: 128, 384>}, {pipeline_mode = #tpu.pipeline_mode<synchronous>, transform_indices = @transform_4, window_bounds = array<i64: 1, 384>}, {pipeline_mode = #tpu.pipeline_mode<synchronous>, transform_indices = @transform_5, window_bounds = array<i64: 1, 384>}, {pipeline_mode = #tpu.pipeline_mode<synchronous>, transform_indices = @transform_6, window_bounds = array<i64: 128, 128>}, {pipeline_mode = #tpu.pipeline_mode<synchronous>, transform_indices = @transform_7, window_bounds = array<i64: 1, 128>}, {pipeline_mode = #tpu.pipeline_mode<synchronous>, transform_indices = @transform_8, window_bounds = array<i64: 8, 128>}, {pipeline_mode = #tpu.pipeline_mode<synchronous>, transform_indices = @transform_9, window_bounds = array<i64: 8, 128>}]} {
    %c0_i32 = arith.constant 0 : i32
    %0 = arith.cmpi eq, %arg0, %c0_i32 : i32
    %1 = arith.extui %0 : i1 to i32
    %c0_i32_0 = arith.constant 0 : i32
    %2 = arith.cmpi ne, %1, %c0_i32_0 : i32
    scf.if %2 {
      %c0_88 = arith.constant 0 : index
      %c0_89 = arith.constant 0 : index
      %272 = vector.load %arg2[%c0_88, %c0_89] : memref<8x128xf32, #tpu.memory_space<vmem>>, vector<8x128xf32>
      %c0_90 = arith.constant 0 : index
      %c0_91 = arith.constant 0 : index
      %273 = vector.load %arg11[%c0_90, %c0_91] : memref<8x128xf32, #tpu.memory_space<vmem>>, vector<8x128xf32>
      tpu.vector_store %arg11[%c0_90, %c0_91], %272 {strides = array<i32>} : memref<8x128xf32, #tpu.memory_space<vmem>>, vector<8x128xf32>,
    } else {
    }
    %c0 = arith.constant 0 : index
    %c0_1 = arith.constant 0 : index
    %c0_2 = arith.constant 0 : index
    %3 = vector.load %arg1[%c0, %c0_1, %c0_2] : memref<8x8x128xf32, #tpu.memory_space<vmem>>, vector<8x8x128xf32>
    %4 = vector.shape_cast %3 : vector<8x8x128xf32> to vector<64x128xf32>
    %c0_3 = arith.constant 0 : index
    %c0_4 = arith.constant 0 : index
    %5 = vector.load %arg3[%c0_3, %c0_4] : memref<128x384xf32, #tpu.memory_space<vmem>>, vector<128x384xf32>
    %cst = arith.constant dense<0.000000e+00> : vector<64x384xf32>
    %6 = tpu.matmul %4, %5, %cst {dimension_numbers = #tpu.dot_dimension_numbers<[1], [0], [0], [1], [0, 0, 1, 1], [], []>} : vector<64x128xf32>, vector<128x384xf32>, vector<64x384xf32> -> vector<64x384xf32>
    %c0_5 = arith.constant 0 : index
    %c0_6 = arith.constant 0 : index
    %7 = vector.load %arg5[%c0_5, %c0_6] : memref<1x384xf32, #tpu.memory_space<vmem>>, vector<1x384xf32>
    %8 = vector.broadcast %7 : vector<1x384xf32> to vector<64x384xf32>
    %9 = arith.addf %6, %8 : vector<64x384xf32>
    %c0_7 = arith.constant 0 : index
    %c0_8 = arith.constant 0 : index
    %10 = vector.load %arg12[%c0_7, %c0_8] : memref<64x384xf32, #tpu.memory_space<vmem>>, vector<64x384xf32>
    tpu.vector_store %arg12[%c0_7, %c0_8], %9 {strides = array<i32>} : memref<64x384xf32, #tpu.memory_space<vmem>>, vector<64x384xf32>,
    %c0_9 = arith.constant 0 : index
    %c0_10 = arith.constant 0 : index
    %11 = vector.load %arg11[%c0_9, %c0_10] : memref<8x128xf32, #tpu.memory_space<vmem>>, vector<8x128xf32>
    %c0_11 = arith.constant 0 : index
    %c0_12 = arith.constant 0 : index
    %12 = vector.load %arg12[%c0_11, %c0_12] : memref<64x384xf32, #tpu.memory_space<vmem>>, vector<8x384xf32>
    %c0_13 = arith.constant 0 : index
    %c0_14 = arith.constant 0 : index
    %13 = vector.load %arg4[%c0_13, %c0_14] : memref<128x384xf32, #tpu.memory_space<vmem>>, vector<128x384xf32>
    %cst_15 = arith.constant dense<0.000000e+00> : vector<8x384xf32>
    %14 = tpu.matmul %11, %13, %cst_15 {dimension_numbers = #tpu.dot_dimension_numbers<[1], [0], [0], [1], [0, 0, 1, 1], [], []>} : vector<8x128xf32>, vector<128x384xf32>, vector<8x384xf32> -> vector<8x384xf32>
    %c0_16 = arith.constant 0 : index
    %c0_17 = arith.constant 0 : index
    %15 = vector.load %arg6[%c0_16, %c0_17] : memref<1x384xf32, #tpu.memory_space<vmem>>, vector<1x384xf32>
    %16 = vector.broadcast %15 : vector<1x384xf32> to vector<8x384xf32>
    %17 = arith.addf %14, %16 : vector<8x384xf32>
    %18 = vector.extract_strided_slice %12 {offsets = [0, 0], sizes = [8, 128], strides = [1, 1]} : vector<8x384xf32> to vector<8x128xf32>
    %19 = vector.extract_strided_slice %17 {offsets = [0, 0], sizes = [8, 128], strides = [1, 1]} : vector<8x384xf32> to vector<8x128xf32>
    %20 = arith.addf %18, %19 : vector<8x128xf32>
    %21 = arith.negf %20 : vector<8x128xf32>
    %22 = math.exp %21 : vector<8x128xf32>
    %cst_18 = arith.constant 1.000000e+00 : f32
    %23 = vector.broadcast %cst_18 : f32 to vector<8x128xf32>
    %24 = arith.addf %23, %22 : vector<8x128xf32>
    %25 = arith.divf %23, %24 : vector<8x128xf32>
    %26 = vector.extract_strided_slice %12 {offsets = [0, 128], sizes = [8, 128], strides = [1, 1]} : vector<8x384xf32> to vector<8x128xf32>
    %27 = vector.extract_strided_slice %17 {offsets = [0, 128], sizes = [8, 128], strides = [1, 1]} : vector<8x384xf32> to vector<8x128xf32>
    %28 = arith.addf %26, %27 : vector<8x128xf32>
    %29 = arith.negf %28 : vector<8x128xf32>
    %30 = math.exp %29 : vector<8x128xf32>
    %cst_19 = arith.constant 1.000000e+00 : f32
    %31 = vector.broadcast %cst_19 : f32 to vector<8x128xf32>
    %32 = arith.addf %31, %30 : vector<8x128xf32>
    %33 = arith.divf %31, %32 : vector<8x128xf32>
    %34 = vector.extract_strided_slice %12 {offsets = [0, 256], sizes = [8, 128], strides = [1, 1]} : vector<8x384xf32> to vector<8x128xf32>
    %35 = vector.extract_strided_slice %17 {offsets = [0, 256], sizes = [8, 128], strides = [1, 1]} : vector<8x384xf32> to vector<8x128xf32>
    %36 = arith.mulf %25, %35 : vector<8x128xf32>
    %37 = arith.addf %34, %36 : vector<8x128xf32>
    %38 = math.tanh %37 : vector<8x128xf32>
    %cst_20 = arith.constant 1.000000e+00 : f32
    %39 = vector.broadcast %cst_20 : f32 to vector<8x128xf32>
    %40 = arith.subf %39, %33 : vector<8x128xf32>
    %41 = arith.mulf %40, %38 : vector<8x128xf32>
    %42 = arith.mulf %33, %11 : vector<8x128xf32>
    %43 = arith.addf %41, %42 : vector<8x128xf32>
    %c8 = arith.constant 8 : index
    %c0_21 = arith.constant 0 : index
    %44 = vector.load %arg12[%c8, %c0_21] : memref<64x384xf32, #tpu.memory_space<vmem>>, vector<8x384xf32>
    %c0_22 = arith.constant 0 : index
    %c0_23 = arith.constant 0 : index
    %45 = vector.load %arg4[%c0_22, %c0_23] : memref<128x384xf32, #tpu.memory_space<vmem>>, vector<128x384xf32>
    %cst_24 = arith.constant dense<0.000000e+00> : vector<8x384xf32>
    %46 = tpu.matmul %43, %45, %cst_24 {dimension_numbers = #tpu.dot_dimension_numbers<[1], [0], [0], [1], [0, 0, 1, 1], [], []>} : vector<8x128xf32>, vector<128x384xf32>, vector<8x384xf32> -> vector<8x384xf32>
    %c0_25 = arith.constant 0 : index
    %c0_26 = arith.constant 0 : index
    %47 = vector.load %arg6[%c0_25, %c0_26] : memref<1x384xf32, #tpu.memory_space<vmem>>, vector<1x384xf32>
    %48 = vector.broadcast %47 : vector<1x384xf32> to vector<8x384xf32>
    %49 = arith.addf %46, %48 : vector<8x384xf32>
    %50 = vector.extract_strided_slice %44 {offsets = [0, 0], sizes = [8, 128], strides = [1, 1]} : vector<8x384xf32> to vector<8x128xf32>
    %51 = vector.extract_strided_slice %49 {offsets = [0, 0], sizes = [8, 128], strides = [1, 1]} : vector<8x384xf32> to vector<8x128xf32>
    %52 = arith.addf %50, %51 : vector<8x128xf32>
    %53 = arith.negf %52 : vector<8x128xf32>
    %54 = math.exp %53 : vector<8x128xf32>
    %cst_27 = arith.constant 1.000000e+00 : f32
    %55 = vector.broadcast %cst_27 : f32 to vector<8x128xf32>
    %56 = arith.addf %55, %54 : vector<8x128xf32>
    %57 = arith.divf %55, %56 : vector<8x128xf32>
    %58 = vector.extract_strided_slice %44 {offsets = [0, 128], sizes = [8, 128], strides = [1, 1]} : vector<8x384xf32> to vector<8x128xf32>
    %59 = vector.extract_strided_slice %49 {offsets = [0, 128], sizes = [8, 128], strides = [1, 1]} : vector<8x384xf32> to vector<8x128xf32>
    %60 = arith.addf %58, %59 : vector<8x128xf32>
    %61 = arith.negf %60 : vector<8x128xf32>
    %62 = math.exp %61 : vector<8x128xf32>
    %cst_28 = arith.constant 1.000000e+00 : f32
    %63 = vector.broadcast %cst_28 : f32 to vector<8x128xf32>
    %64 = arith.addf %63, %62 : vector<8x128xf32>
    %65 = arith.divf %63, %64 : vector<8x128xf32>
    %66 = vector.extract_strided_slice %44 {offsets = [0, 256], sizes = [8, 128], strides = [1, 1]} : vector<8x384xf32> to vector<8x128xf32>
    %67 = vector.extract_strided_slice %49 {offsets = [0, 256], sizes = [8, 128], strides = [1, 1]} : vector<8x384xf32> to vector<8x128xf32>
    %68 = arith.mulf %57, %67 : vector<8x128xf32>
    %69 = arith.addf %66, %68 : vector<8x128xf32>
    %70 = math.tanh %69 : vector<8x128xf32>
    %cst_29 = arith.constant 1.000000e+00 : f32
    %71 = vector.broadcast %cst_29 : f32 to vector<8x128xf32>
    %72 = arith.subf %71, %65 : vector<8x128xf32>
    %73 = arith.mulf %72, %70 : vector<8x128xf32>
    %74 = arith.mulf %65, %43 : vector<8x128xf32>
    %75 = arith.addf %73, %74 : vector<8x128xf32>
    %c16 = arith.constant 16 : index
    %c0_30 = arith.constant 0 : index
    %76 = vector.load %arg12[%c16, %c0_30] : memref<64x384xf32, #tpu.memory_space<vmem>>, vector<8x384xf32>
    %c0_31 = arith.constant 0 : index
    %c0_32 = arith.constant 0 : index
    %77 = vector.load %arg4[%c0_31, %c0_32] : memref<128x384xf32, #tpu.memory_space<vmem>>, vector<128x384xf32>
    %cst_33 = arith.constant dense<0.000000e+00> : vector<8x384xf32>
    %78 = tpu.matmul %75, %77, %cst_33 {dimension_numbers = #tpu.dot_dimension_numbers<[1], [0], [0], [1], [0, 0, 1, 1], [], []>} : vector<8x128xf32>, vector<128x384xf32>, vector<8x384xf32> -> vector<8x384xf32>
    %c0_34 = arith.constant 0 : index
    %c0_35 = arith.constant 0 : index
    %79 = vector.load %arg6[%c0_34, %c0_35] : memref<1x384xf32, #tpu.memory_space<vmem>>, vector<1x384xf32>
    %80 = vector.broadcast %79 : vector<1x384xf32> to vector<8x384xf32>
    %81 = arith.addf %78, %80 : vector<8x384xf32>
    %82 = vector.extract_strided_slice %76 {offsets = [0, 0], sizes = [8, 128], strides = [1, 1]} : vector<8x384xf32> to vector<8x128xf32>
    %83 = vector.extract_strided_slice %81 {offsets = [0, 0], sizes = [8, 128], strides = [1, 1]} : vector<8x384xf32> to vector<8x128xf32>
    %84 = arith.addf %82, %83 : vector<8x128xf32>
    %85 = arith.negf %84 : vector<8x128xf32>
    %86 = math.exp %85 : vector<8x128xf32>
    %cst_36 = arith.constant 1.000000e+00 : f32
    %87 = vector.broadcast %cst_36 : f32 to vector<8x128xf32>
    %88 = arith.addf %87, %86 : vector<8x128xf32>
    %89 = arith.divf %87, %88 : vector<8x128xf32>
    %90 = vector.extract_strided_slice %76 {offsets = [0, 128], sizes = [8, 128], strides = [1, 1]} : vector<8x384xf32> to vector<8x128xf32>
    %91 = vector.extract_strided_slice %81 {offsets = [0, 128], sizes = [8, 128], strides = [1, 1]} : vector<8x384xf32> to vector<8x128xf32>
    %92 = arith.addf %90, %91 : vector<8x128xf32>
    %93 = arith.negf %92 : vector<8x128xf32>
    %94 = math.exp %93 : vector<8x128xf32>
    %cst_37 = arith.constant 1.000000e+00 : f32
    %95 = vector.broadcast %cst_37 : f32 to vector<8x128xf32>
    %96 = arith.addf %95, %94 : vector<8x128xf32>
    %97 = arith.divf %95, %96 : vector<8x128xf32>
    %98 = vector.extract_strided_slice %76 {offsets = [0, 256], sizes = [8, 128], strides = [1, 1]} : vector<8x384xf32> to vector<8x128xf32>
    %99 = vector.extract_strided_slice %81 {offsets = [0, 256], sizes = [8, 128], strides = [1, 1]} : vector<8x384xf32> to vector<8x128xf32>
    %100 = arith.mulf %89, %99 : vector<8x128xf32>
    %101 = arith.addf %98, %100 : vector<8x128xf32>
    %102 = math.tanh %101 : vector<8x128xf32>
    %cst_38 = arith.constant 1.000000e+00 : f32
    %103 = vector.broadcast %cst_38 : f32 to vector<8x128xf32>
    %104 = arith.subf %103, %97 : vector<8x128xf32>
    %105 = arith.mulf %104, %102 : vector<8x128xf32>
    %106 = arith.mulf %97, %75 : vector<8x128xf32>
    %107 = arith.addf %105, %106 : vector<8x128xf32>
    %c24 = arith.constant 24 : index
    %c0_39 = arith.constant 0 : index
    %108 = vector.load %arg12[%c24, %c0_39] : memref<64x384xf32, #tpu.memory_space<vmem>>, vector<8x384xf32>
    %c0_40 = arith.constant 0 : index
    %c0_41 = arith.constant 0 : index
    %109 = vector.load %arg4[%c0_40, %c0_41] : memref<128x384xf32, #tpu.memory_space<vmem>>, vector<128x384xf32>
    %cst_42 = arith.constant dense<0.000000e+00> : vector<8x384xf32>
    %110 = tpu.matmul %107, %109, %cst_42 {dimension_numbers = #tpu.dot_dimension_numbers<[1], [0], [0], [1], [0, 0, 1, 1], [], []>} : vector<8x128xf32>, vector<128x384xf32>, vector<8x384xf32> -> vector<8x384xf32>
    %c0_43 = arith.constant 0 : index
    %c0_44 = arith.constant 0 : index
    %111 = vector.load %arg6[%c0_43, %c0_44] : memref<1x384xf32, #tpu.memory_space<vmem>>, vector<1x384xf32>
    %112 = vector.broadcast %111 : vector<1x384xf32> to vector<8x384xf32>
    %113 = arith.addf %110, %112 : vector<8x384xf32>
    %114 = vector.extract_strided_slice %108 {offsets = [0, 0], sizes = [8, 128], strides = [1, 1]} : vector<8x384xf32> to vector<8x128xf32>
    %115 = vector.extract_strided_slice %113 {offsets = [0, 0], sizes = [8, 128], strides = [1, 1]} : vector<8x384xf32> to vector<8x128xf32>
    %116 = arith.addf %114, %115 : vector<8x128xf32>
    %117 = arith.negf %116 : vector<8x128xf32>
    %118 = math.exp %117 : vector<8x128xf32>
    %cst_45 = arith.constant 1.000000e+00 : f32
    %119 = vector.broadcast %cst_45 : f32 to vector<8x128xf32>
    %120 = arith.addf %119, %118 : vector<8x128xf32>
    %121 = arith.divf %119, %120 : vector<8x128xf32>
    %122 = vector.extract_strided_slice %108 {offsets = [0, 128], sizes = [8, 128], strides = [1, 1]} : vector<8x384xf32> to vector<8x128xf32>
    %123 = vector.extract_strided_slice %113 {offsets = [0, 128], sizes = [8, 128], strides = [1, 1]} : vector<8x384xf32> to vector<8x128xf32>
    %124 = arith.addf %122, %123 : vector<8x128xf32>
    %125 = arith.negf %124 : vector<8x128xf32>
    %126 = math.exp %125 : vector<8x128xf32>
    %cst_46 = arith.constant 1.000000e+00 : f32
    %127 = vector.broadcast %cst_46 : f32 to vector<8x128xf32>
    %128 = arith.addf %127, %126 : vector<8x128xf32>
    %129 = arith.divf %127, %128 : vector<8x128xf32>
    %130 = vector.extract_strided_slice %108 {offsets = [0, 256], sizes = [8, 128], strides = [1, 1]} : vector<8x384xf32> to vector<8x128xf32>
    %131 = vector.extract_strided_slice %113 {offsets = [0, 256], sizes = [8, 128], strides = [1, 1]} : vector<8x384xf32> to vector<8x128xf32>
    %132 = arith.mulf %121, %131 : vector<8x128xf32>
    %133 = arith.addf %130, %132 : vector<8x128xf32>
    %134 = math.tanh %133 : vector<8x128xf32>
    %cst_47 = arith.constant 1.000000e+00 : f32
    %135 = vector.broadcast %cst_47 : f32 to vector<8x128xf32>
    %136 = arith.subf %135, %129 : vector<8x128xf32>
    %137 = arith.mulf %136, %134 : vector<8x128xf32>
    %138 = arith.mulf %129, %107 : vector<8x128xf32>
    %139 = arith.addf %137, %138 : vector<8x128xf32>
    %c32 = arith.constant 32 : index
    %c0_48 = arith.constant 0 : index
    %140 = vector.load %arg12[%c32, %c0_48] : memref<64x384xf32, #tpu.memory_space<vmem>>, vector<8x384xf32>
    %c0_49 = arith.constant 0 : index
    %c0_50 = arith.constant 0 : index
    %141 = vector.load %arg4[%c0_49, %c0_50] : memref<128x384xf32, #tpu.memory_space<vmem>>, vector<128x384xf32>
    %cst_51 = arith.constant dense<0.000000e+00> : vector<8x384xf32>
    %142 = tpu.matmul %139, %141, %cst_51 {dimension_numbers = #tpu.dot_dimension_numbers<[1], [0], [0], [1], [0, 0, 1, 1], [], []>} : vector<8x128xf32>, vector<128x384xf32>, vector<8x384xf32> -> vector<8x384xf32>
    %c0_52 = arith.constant 0 : index
    %c0_53 = arith.constant 0 : index
    %143 = vector.load %arg6[%c0_52, %c0_53] : memref<1x384xf32, #tpu.memory_space<vmem>>, vector<1x384xf32>
    %144 = vector.broadcast %143 : vector<1x384xf32> to vector<8x384xf32>
    %145 = arith.addf %142, %144 : vector<8x384xf32>
    %146 = vector.extract_strided_slice %140 {offsets = [0, 0], sizes = [8, 128], strides = [1, 1]} : vector<8x384xf32> to vector<8x128xf32>
    %147 = vector.extract_strided_slice %145 {offsets = [0, 0], sizes = [8, 128], strides = [1, 1]} : vector<8x384xf32> to vector<8x128xf32>
    %148 = arith.addf %146, %147 : vector<8x128xf32>
    %149 = arith.negf %148 : vector<8x128xf32>
    %150 = math.exp %149 : vector<8x128xf32>
    %cst_54 = arith.constant 1.000000e+00 : f32
    %151 = vector.broadcast %cst_54 : f32 to vector<8x128xf32>
    %152 = arith.addf %151, %150 : vector<8x128xf32>
    %153 = arith.divf %151, %152 : vector<8x128xf32>
    %154 = vector.extract_strided_slice %140 {offsets = [0, 128], sizes = [8, 128], strides = [1, 1]} : vector<8x384xf32> to vector<8x128xf32>
    %155 = vector.extract_strided_slice %145 {offsets = [0, 128], sizes = [8, 128], strides = [1, 1]} : vector<8x384xf32> to vector<8x128xf32>
    %156 = arith.addf %154, %155 : vector<8x128xf32>
    %157 = arith.negf %156 : vector<8x128xf32>
    %158 = math.exp %157 : vector<8x128xf32>
    %cst_55 = arith.constant 1.000000e+00 : f32
    %159 = vector.broadcast %cst_55 : f32 to vector<8x128xf32>
    %160 = arith.addf %159, %158 : vector<8x128xf32>
    %161 = arith.divf %159, %160 : vector<8x128xf32>
    %162 = vector.extract_strided_slice %140 {offsets = [0, 256], sizes = [8, 128], strides = [1, 1]} : vector<8x384xf32> to vector<8x128xf32>
    %163 = vector.extract_strided_slice %145 {offsets = [0, 256], sizes = [8, 128], strides = [1, 1]} : vector<8x384xf32> to vector<8x128xf32>
    %164 = arith.mulf %153, %163 : vector<8x128xf32>
    %165 = arith.addf %162, %164 : vector<8x128xf32>
    %166 = math.tanh %165 : vector<8x128xf32>
    %cst_56 = arith.constant 1.000000e+00 : f32
    %167 = vector.broadcast %cst_56 : f32 to vector<8x128xf32>
    %168 = arith.subf %167, %161 : vector<8x128xf32>
    %169 = arith.mulf %168, %166 : vector<8x128xf32>
    %170 = arith.mulf %161, %139 : vector<8x128xf32>
    %171 = arith.addf %169, %170 : vector<8x128xf32>
    %c40 = arith.constant 40 : index
    %c0_57 = arith.constant 0 : index
    %172 = vector.load %arg12[%c40, %c0_57] : memref<64x384xf32, #tpu.memory_space<vmem>>, vector<8x384xf32>
    %c0_58 = arith.constant 0 : index
    %c0_59 = arith.constant 0 : index
    %173 = vector.load %arg4[%c0_58, %c0_59] : memref<128x384xf32, #tpu.memory_space<vmem>>, vector<128x384xf32>
    %cst_60 = arith.constant dense<0.000000e+00> : vector<8x384xf32>
    %174 = tpu.matmul %171, %173, %cst_60 {dimension_numbers = #tpu.dot_dimension_numbers<[1], [0], [0], [1], [0, 0, 1, 1], [], []>} : vector<8x128xf32>, vector<128x384xf32>, vector<8x384xf32> -> vector<8x384xf32>
    %c0_61 = arith.constant 0 : index
    %c0_62 = arith.constant 0 : index
    %175 = vector.load %arg6[%c0_61, %c0_62] : memref<1x384xf32, #tpu.memory_space<vmem>>, vector<1x384xf32>
    %176 = vector.broadcast %175 : vector<1x384xf32> to vector<8x384xf32>
    %177 = arith.addf %174, %176 : vector<8x384xf32>
    %178 = vector.extract_strided_slice %172 {offsets = [0, 0], sizes = [8, 128], strides = [1, 1]} : vector<8x384xf32> to vector<8x128xf32>
    %179 = vector.extract_strided_slice %177 {offsets = [0, 0], sizes = [8, 128], strides = [1, 1]} : vector<8x384xf32> to vector<8x128xf32>
    %180 = arith.addf %178, %179 : vector<8x128xf32>
    %181 = arith.negf %180 : vector<8x128xf32>
    %182 = math.exp %181 : vector<8x128xf32>
    %cst_63 = arith.constant 1.000000e+00 : f32
    %183 = vector.broadcast %cst_63 : f32 to vector<8x128xf32>
    %184 = arith.addf %183, %182 : vector<8x128xf32>
    %185 = arith.divf %183, %184 : vector<8x128xf32>
    %186 = vector.extract_strided_slice %172 {offsets = [0, 128], sizes = [8, 128], strides = [1, 1]} : vector<8x384xf32> to vector<8x128xf32>
    %187 = vector.extract_strided_slice %177 {offsets = [0, 128], sizes = [8, 128], strides = [1, 1]} : vector<8x384xf32> to vector<8x128xf32>
    %188 = arith.addf %186, %187 : vector<8x128xf32>
    %189 = arith.negf %188 : vector<8x128xf32>
    %190 = math.exp %189 : vector<8x128xf32>
    %cst_64 = arith.constant 1.000000e+00 : f32
    %191 = vector.broadcast %cst_64 : f32 to vector<8x128xf32>
    %192 = arith.addf %191, %190 : vector<8x128xf32>
    %193 = arith.divf %191, %192 : vector<8x128xf32>
    %194 = vector.extract_strided_slice %172 {offsets = [0, 256], sizes = [8, 128], strides = [1, 1]} : vector<8x384xf32> to vector<8x128xf32>
    %195 = vector.extract_strided_slice %177 {offsets = [0, 256], sizes = [8, 128], strides = [1, 1]} : vector<8x384xf32> to vector<8x128xf32>
    %196 = arith.mulf %185, %195 : vector<8x128xf32>
    %197 = arith.addf %194, %196 : vector<8x128xf32>
    %198 = math.tanh %197 : vector<8x128xf32>
    %cst_65 = arith.constant 1.000000e+00 : f32
    %199 = vector.broadcast %cst_65 : f32 to vector<8x128xf32>
    %200 = arith.subf %199, %193 : vector<8x128xf32>
    %201 = arith.mulf %200, %198 : vector<8x128xf32>
    %202 = arith.mulf %193, %171 : vector<8x128xf32>
    %203 = arith.addf %201, %202 : vector<8x128xf32>
    %c48 = arith.constant 48 : index
    %c0_66 = arith.constant 0 : index
    %204 = vector.load %arg12[%c48, %c0_66] : memref<64x384xf32, #tpu.memory_space<vmem>>, vector<8x384xf32>
    %c0_67 = arith.constant 0 : index
    %c0_68 = arith.constant 0 : index
    %205 = vector.load %arg4[%c0_67, %c0_68] : memref<128x384xf32, #tpu.memory_space<vmem>>, vector<128x384xf32>
    %cst_69 = arith.constant dense<0.000000e+00> : vector<8x384xf32>
    %206 = tpu.matmul %203, %205, %cst_69 {dimension_numbers = #tpu.dot_dimension_numbers<[1], [0], [0], [1], [0, 0, 1, 1], [], []>} : vector<8x128xf32>, vector<128x384xf32>, vector<8x384xf32> -> vector<8x384xf32>
    %c0_70 = arith.constant 0 : index
    %c0_71 = arith.constant 0 : index
    %207 = vector.load %arg6[%c0_70, %c0_71] : memref<1x384xf32, #tpu.memory_space<vmem>>, vector<1x384xf32>
    %208 = vector.broadcast %207 : vector<1x384xf32> to vector<8x384xf32>
    %209 = arith.addf %206, %208 : vector<8x384xf32>
    %210 = vector.extract_strided_slice %204 {offsets = [0, 0], sizes = [8, 128], strides = [1, 1]} : vector<8x384xf32> to vector<8x128xf32>
    %211 = vector.extract_strided_slice %209 {offsets = [0, 0], sizes = [8, 128], strides = [1, 1]} : vector<8x384xf32> to vector<8x128xf32>
    %212 = arith.addf %210, %211 : vector<8x128xf32>
    %213 = arith.negf %212 : vector<8x128xf32>
    %214 = math.exp %213 : vector<8x128xf32>
    %cst_72 = arith.constant 1.000000e+00 : f32
    %215 = vector.broadcast %cst_72 : f32 to vector<8x128xf32>
    %216 = arith.addf %215, %214 : vector<8x128xf32>
    %217 = arith.divf %215, %216 : vector<8x128xf32>
    %218 = vector.extract_strided_slice %204 {offsets = [0, 128], sizes = [8, 128], strides = [1, 1]} : vector<8x384xf32> to vector<8x128xf32>
    %219 = vector.extract_strided_slice %209 {offsets = [0, 128], sizes = [8, 128], strides = [1, 1]} : vector<8x384xf32> to vector<8x128xf32>
    %220 = arith.addf %218, %219 : vector<8x128xf32>
    %221 = arith.negf %220 : vector<8x128xf32>
    %222 = math.exp %221 : vector<8x128xf32>
    %cst_73 = arith.constant 1.000000e+00 : f32
    %223 = vector.broadcast %cst_73 : f32 to vector<8x128xf32>
    %224 = arith.addf %223, %222 : vector<8x128xf32>
    %225 = arith.divf %223, %224 : vector<8x128xf32>
    %226 = vector.extract_strided_slice %204 {offsets = [0, 256], sizes = [8, 128], strides = [1, 1]} : vector<8x384xf32> to vector<8x128xf32>
    %227 = vector.extract_strided_slice %209 {offsets = [0, 256], sizes = [8, 128], strides = [1, 1]} : vector<8x384xf32> to vector<8x128xf32>
    %228 = arith.mulf %217, %227 : vector<8x128xf32>
    %229 = arith.addf %226, %228 : vector<8x128xf32>
    %230 = math.tanh %229 : vector<8x128xf32>
    %cst_74 = arith.constant 1.000000e+00 : f32
    %231 = vector.broadcast %cst_74 : f32 to vector<8x128xf32>
    %232 = arith.subf %231, %225 : vector<8x128xf32>
    %233 = arith.mulf %232, %230 : vector<8x128xf32>
    %234 = arith.mulf %225, %203 : vector<8x128xf32>
    %235 = arith.addf %233, %234 : vector<8x128xf32>
    %c56 = arith.constant 56 : index
    %c0_75 = arith.constant 0 : index
    %236 = vector.load %arg12[%c56, %c0_75] : memref<64x384xf32, #tpu.memory_space<vmem>>, vector<8x384xf32>
    %c0_76 = arith.constant 0 : index
    %c0_77 = arith.constant 0 : index
    %237 = vector.load %arg4[%c0_76, %c0_77] : memref<128x384xf32, #tpu.memory_space<vmem>>, vector<128x384xf32>
    %cst_78 = arith.constant dense<0.000000e+00> : vector<8x384xf32>
    %238 = tpu.matmul %235, %237, %cst_78 {dimension_numbers = #tpu.dot_dimension_numbers<[1], [0], [0], [1], [0, 0, 1, 1], [], []>} : vector<8x128xf32>, vector<128x384xf32>, vector<8x384xf32> -> vector<8x384xf32>
    %c0_79 = arith.constant 0 : index
    %c0_80 = arith.constant 0 : index
    %239 = vector.load %arg6[%c0_79, %c0_80] : memref<1x384xf32, #tpu.memory_space<vmem>>, vector<1x384xf32>
    %240 = vector.broadcast %239 : vector<1x384xf32> to vector<8x384xf32>
    %241 = arith.addf %238, %240 : vector<8x384xf32>
    %242 = vector.extract_strided_slice %236 {offsets = [0, 0], sizes = [8, 128], strides = [1, 1]} : vector<8x384xf32> to vector<8x128xf32>
    %243 = vector.extract_strided_slice %241 {offsets = [0, 0], sizes = [8, 128], strides = [1, 1]} : vector<8x384xf32> to vector<8x128xf32>
    %244 = arith.addf %242, %243 : vector<8x128xf32>
    %245 = arith.negf %244 : vector<8x128xf32>
    %246 = math.exp %245 : vector<8x128xf32>
    %cst_81 = arith.constant 1.000000e+00 : f32
    %247 = vector.broadcast %cst_81 : f32 to vector<8x128xf32>
    %248 = arith.addf %247, %246 : vector<8x128xf32>
    %249 = arith.divf %247, %248 : vector<8x128xf32>
    %250 = vector.extract_strided_slice %236 {offsets = [0, 128], sizes = [8, 128], strides = [1, 1]} : vector<8x384xf32> to vector<8x128xf32>
    %251 = vector.extract_strided_slice %241 {offsets = [0, 128], sizes = [8, 128], strides = [1, 1]} : vector<8x384xf32> to vector<8x128xf32>
    %252 = arith.addf %250, %251 : vector<8x128xf32>
    %253 = arith.negf %252 : vector<8x128xf32>
    %254 = math.exp %253 : vector<8x128xf32>
    %cst_82 = arith.constant 1.000000e+00 : f32
    %255 = vector.broadcast %cst_82 : f32 to vector<8x128xf32>
    %256 = arith.addf %255, %254 : vector<8x128xf32>
    %257 = arith.divf %255, %256 : vector<8x128xf32>
    %258 = vector.extract_strided_slice %236 {offsets = [0, 256], sizes = [8, 128], strides = [1, 1]} : vector<8x384xf32> to vector<8x128xf32>
    %259 = vector.extract_strided_slice %241 {offsets = [0, 256], sizes = [8, 128], strides = [1, 1]} : vector<8x384xf32> to vector<8x128xf32>
    %260 = arith.mulf %249, %259 : vector<8x128xf32>
    %261 = arith.addf %258, %260 : vector<8x128xf32>
    %262 = math.tanh %261 : vector<8x128xf32>
    %cst_83 = arith.constant 1.000000e+00 : f32
    %263 = vector.broadcast %cst_83 : f32 to vector<8x128xf32>
    %264 = arith.subf %263, %257 : vector<8x128xf32>
    %265 = arith.mulf %264, %262 : vector<8x128xf32>
    %266 = arith.mulf %257, %235 : vector<8x128xf32>
    %267 = arith.addf %265, %266 : vector<8x128xf32>
    %c0_84 = arith.constant 0 : index
    %c0_85 = arith.constant 0 : index
    %268 = vector.load %arg11[%c0_84, %c0_85] : memref<8x128xf32, #tpu.memory_space<vmem>>, vector<8x128xf32>
    tpu.vector_store %arg11[%c0_84, %c0_85], %267 {strides = array<i32>} : memref<8x128xf32, #tpu.memory_space<vmem>>, vector<8x128xf32>,
    %c0_i32_86 = arith.constant 0 : i32
    %269 = arith.cmpi eq, %arg0, %c0_i32_86 : i32
    %270 = arith.extui %269 : i1 to i32
    %c0_i32_87 = arith.constant 0 : i32
    %271 = arith.cmpi ne, %270, %c0_i32_87 : i32
    scf.if %271 {
      %c0_88 = arith.constant 0 : index
      %c0_89 = arith.constant 0 : index
      %272 = vector.load %arg10[%c0_88, %c0_89] : memref<8x128xf32, #tpu.memory_space<vmem>>, vector<8x128xf32>
      tpu.vector_store %arg10[%c0_88, %c0_89], %267 {strides = array<i32>} : memref<8x128xf32, #tpu.memory_space<vmem>>, vector<8x128xf32>,
      %c0_90 = arith.constant 0 : index
      %c0_91 = arith.constant 0 : index
      %273 = vector.load %arg7[%c0_90, %c0_91] : memref<128x128xf32, #tpu.memory_space<vmem>>, vector<128x128xf32>
      %cst_92 = arith.constant dense<0.000000e+00> : vector<8x128xf32>
      %274 = tpu.matmul %267, %273, %cst_92 {dimension_numbers = #tpu.dot_dimension_numbers<[1], [0], [0], [1], [0, 0, 1, 1], [], []>} : vector<8x128xf32>, vector<128x128xf32>, vector<8x128xf32> -> vector<8x128xf32>
      %c0_93 = arith.constant 0 : index
      %c0_94 = arith.constant 0 : index
      %275 = vector.load %arg8[%c0_93, %c0_94] : memref<1x128xf32, #tpu.memory_space<vmem>>, vector<1x128xf32>
      %276 = vector.broadcast %275 : vector<1x128xf32> to vector<8x128xf32>
      %277 = arith.addf %274, %276 : vector<8x128xf32>
      %cst_95 = arith.constant dense<0xFF800000> : vector<8xf32>
      %278 = vector.multi_reduction <maximumf>, %277, %cst_95 [1] : vector<8x128xf32> to vector<8xf32>
      %279 = vector.shape_cast %278 : vector<8xf32> to vector<8x1xf32>
      %280 = vector.broadcast %279 : vector<8x1xf32> to vector<8x128xf32>
      %281 = arith.subf %277, %280 : vector<8x128xf32>
      %282 = math.exp %281 : vector<8x128xf32>
      %cst_96 = arith.constant dense<0.000000e+00> : vector<8xf32>
      %283 = vector.multi_reduction <add>, %282, %cst_96 [1] : vector<8x128xf32> to vector<8xf32>
      %284 = vector.shape_cast %283 : vector<8xf32> to vector<8x1xf32>
      %285 = math.log %284 : vector<8x1xf32>
      %286 = vector.broadcast %285 : vector<8x1xf32> to vector<8x128xf32>
      %287 = arith.subf %281, %286 : vector<8x128xf32>
      %c0_97 = arith.constant 0 : index
      %c0_98 = arith.constant 0 : index
      %288 = vector.load %arg9[%c0_97, %c0_98] : memref<8x128xf32, #tpu.memory_space<vmem>>, vector<8x128xf32>
      tpu.vector_store %arg9[%c0_97, %c0_98], %287 {strides = array<i32>} : memref<8x128xf32, #tpu.memory_space<vmem>>, vector<8x128xf32>,
    } else {
    }
    return
  }
  func.func @transform_0(%arg0: i32) -> (i32, i32, i32) {
    %c0_i32 = arith.constant 0 : i32
    %c0_i32_0 = arith.constant 0 : i32
    %c0_i32_1 = arith.constant 0 : i32
    return %arg0, %c0_i32, %c0_i32_0 : i32, i32, i32
  }
  func.func @transform_1(%arg0: i32) -> (i32, i32) {
    %c0_i32 = arith.constant 0 : i32
    %c0_i32_0 = arith.constant 0 : i32
    %c0_i32_1 = arith.constant 0 : i32
    return %c0_i32, %c0_i32_0 : i32, i32
  }
  func.func @transform_2(%arg0: i32) -> (i32, i32) {
    %c0_i32 = arith.constant 0 : i32
    %c0_i32_0 = arith.constant 0 : i32
    %c0_i32_1 = arith.constant 0 : i32
    return %c0_i32, %c0_i32_0 : i32, i32
  }
  func.func @transform_3(%arg0: i32) -> (i32, i32) {
    %c0_i32 = arith.constant 0 : i32
    %c0_i32_0 = arith.constant 0 : i32
    %c0_i32_1 = arith.constant 0 : i32
    return %c0_i32, %c0_i32_0 : i32, i32
  }
  func.func @transform_4(%arg0: i32) -> (i32, i32) {
    %c0_i32 = arith.constant 0 : i32
    %c0_i32_0 = arith.constant 0 : i32
    %c0_i32_1 = arith.constant 0 : i32
    return %c0_i32, %c0_i32_0 : i32, i32
  }
  func.func @transform_5(%arg0: i32) -> (i32, i32) {
    %c0_i32 = arith.constant 0 : i32
    %c0_i32_0 = arith.constant 0 : i32
    %c0_i32_1 = arith.constant 0 : i32
    return %c0_i32, %c0_i32_0 : i32, i32
  }
  func.func @transform_6(%arg0: i32) -> (i32, i32) {
    %c0_i32 = arith.constant 0 : i32
    %c0_i32_0 = arith.constant 0 : i32
    %c0_i32_1 = arith.constant 0 : i32
    return %c0_i32, %c0_i32_0 : i32, i32
  }
  func.func @transform_7(%arg0: i32) -> (i32, i32) {
    %c0_i32 = arith.constant 0 : i32
    %c0_i32_0 = arith.constant 0 : i32
    %c0_i32_1 = arith.constant 0 : i32
    return %c0_i32, %c0_i32_0 : i32, i32
  }
  func.func @transform_8(%arg0: i32) -> (i32, i32) {
    %c0_i32 = arith.constant 0 : i32
    %c0_i32_0 = arith.constant 0 : i32
    %c0_i32_1 = arith.constant 0 : i32
    return %c0_i32, %c0_i32_0 : i32, i32
  }
  func.func @transform_9(%arg0: i32) -> (i32, i32) {
    %c0_i32 = arith.constant 0 : i32
    %c0_i32_0 = arith.constant 0 : i32
    %c0_i32_1 = arith.constant 0 : i32
    return %c0_i32, %c0_i32_0 : i32, i32
  }
}

</mosaic_0001>

<llo_original>
// kernel: name_classifier_gru_forward.1
$region0: #{name_classifier_gru_forward.1}
  #allocation0 [shape = 'u32[]', space=smem, size = 0x4, offset = 0x4, fixed_abs, tag = 'smem constant byte address 0x4 - core index']
  #allocation1 [shape = 'u32[144,128]{1,0:T(1,128)}', space=vmem, size = 0x12000, scoped, tag = 'internal scratch']
  #allocation2 [shape = 'f32[8,128]{1,0:T(8,128)}', space=vmem, size = 0x1000, scoped, tag = 'scratch operand']
  #allocation3 [shape = 'f32[64,384]{1,0:T(8,128)}', space=vmem, size = 0x18000, scoped, tag = 'scratch operand']
  %s0 = inlined_call_operand.vmem [shape: f32[8,8,128], index: 0, kind: input, shape index: {}]
  %s1 = inlined_call_operand.vmem [shape: f32[8,128], index: 1, kind: input, shape index: {}]
  %s2 = inlined_call_operand.vmem [shape: f32[128,384], index: 2, kind: input, shape index: {}]
  %s3 = inlined_call_operand.vmem [shape: f32[128,384], index: 3, kind: input, shape index: {}]
  %s4 = inlined_call_operand.vmem [shape: f32[1,384], index: 4, kind: input, shape index: {}]
  %s5 = inlined_call_operand.vmem [shape: f32[1,384], index: 5, kind: input, shape index: {}]
  %s6 = inlined_call_operand.vmem [shape: f32[128,128], index: 6, kind: input, shape index: {}]
  %s7 = inlined_call_operand.vmem [shape: f32[1,128], index: 7, kind: input, shape index: {}]
  %s8 = inlined_call_operand.vmem [shape: f32[8,128], index: 8, kind: output, shape index: {0}]
  %s9 = inlined_call_operand.vmem [shape: f32[8,128], index: 9, kind: output, shape index: {1}]
  %10 = xla_tuple %s8, %s9
  %s11 = sld [smem:[#allocation0]]
  $region58: #{name_classifier_gru_forward.1} parent=0
    _
  %s13 = ssub.s32 1, %s11
  %s14 = scalar_select 0, %s13, %s11
  // Predicated region
  $region2: #{name_classifier_gru_forward.1} parent=0 // pred_check
    _
  $region3: #{name_classifier_gru_forward.1} parent=0 // pred_check_branch
    %16 = sbr.rel (0) target = $region5
  $region4: #{name_classifier_gru_forward.1} parent=0 // pred_region
    _
  $region5: #{name_classifier_gru_forward.1} parent=0 // pred_fallthru
    _
  // Predicated region
  $region6: #{name_classifier_gru_forward.1} parent=0 // pred_check
    _
  $region7: #{name_classifier_gru_forward.1} parent=0 // pred_check_branch
    %18 = sbr.rel (0) target = $region9
  $region8: #{name_classifier_gru_forward.1} parent=0 // pred_region
    _
  $region9: #{name_classifier_gru_forward.1} parent=0 // pred_fallthru
    _
  // Predicated region
  $region10: #{name_classifier_gru_forward.1} parent=0 // pred_check
    _
  $region11: #{name_classifier_gru_forward.1} parent=0 // pred_check_branch
    %20 = sbr.rel (0) target = $region13
  $region12: #{name_classifier_gru_forward.1} parent=0 // pred_region
    _
  $region13: #{name_classifier_gru_forward.1} parent=0 // pred_fallthru
    _
  // Predicated region
  $region14: #{name_classifier_gru_forward.1} parent=0 // pred_check
    _
  $region15: #{name_classifier_gru_forward.1} parent=0 // pred_check_branch
    %22 = sbr.rel (0) target = $region17
  $region16: #{name_classifier_gru_forward.1} parent=0 // pred_region
    _
  $region17: #{name_classifier_gru_forward.1} parent=0 // pred_fallthru
    _
  // Predicated region
  $region18: #{name_classifier_gru_forward.1} parent=0 // pred_check
    _
  $region19: #{name_classifier_gru_forward.1} parent=0 // pred_check_branch
    %24 = sbr.rel (0) target = $region21
  $region20: #{name_classifier_gru_forward.1} parent=0 // pred_region
    _
  $region21: #{name_classifier_gru_forward.1} parent=0 // pred_fallthru
    _
  // Predicated region
  $region22: #{name_classifier_gru_forward.1} parent=0 // pred_check
    _
  $region23: #{name_classifier_gru_forward.1} parent=0 // pred_check_branch
    %26 = sbr.rel (0) target = $region25
  $region24: #{name_classifier_gru_forward.1} parent=0 // pred_region
    _
  $region25: #{name_classifier_gru_forward.1} parent=0 // pred_fallthru
    _
  // Predicated region
  $region26: #{name_classifier_gru_forward.1} parent=0 // pred_check
    _
  $region27: #{name_classifier_gru_forward.1} parent=0 // pred_check_branch
    %28 = sbr.rel (0) target = $region29
  $region28: #{name_classifier_gru_forward.1} parent=0 // pred_region
    _
  $region29: #{name_classifier_gru_forward.1} parent=0 // pred_fallthru
    _
  // Predicated region
  $region30: #{name_classifier_gru_forward.1} parent=0 // pred_check
    _
  $region31: #{name_classifier_gru_forward.1} parent=0 // pred_check_branch
    %30 = sbr.rel (0) target = $region33
  $region32: #{name_classifier_gru_forward.1} parent=0 // pred_region
    _
  $region33: #{name_classifier_gru_forward.1} parent=0 // pred_fallthru
    _
  %p31 = scmp.eq.s32.totalorder 0, 0
  // Predicated region
  $region34: #{name_classifier_gru_forward.1} parent=0 // pred_check
    %p32 = pneg %p31
  $region35: #{name_classifier_gru_forward.1} parent=0 // pred_check_branch
    %34 = sbr.rel (%p32) target = $region37
  $region36: #{name_classifier_gru_forward.1} parent=0 // pred_region
    %v35 = vld [vmem:[%s1] sm:$0xff]
    %36 = vst [vmem:[#allocation2] sm:$0xff] %v35
  $region37: #{name_classifier_gru_forward.1} parent=0 // pred_fallthru
    _
  %v37 = vld [vmem:[%s0] sm:$0xff]
  %v38 = vld [vmem:[%s0 + $0x8] sm:$0xff]
  %v39 = vld [vmem:[%s0 + $0x10] sm:$0xff]
  %v40 = vld [vmem:[%s0 + $0x18] sm:$0xff]
  %v41 = vld [vmem:[%s0 + $0x20] sm:$0xff]
  %v42 = vld [vmem:[%s0 + $0x28] sm:$0xff]
  %v43 = vld [vmem:[%s0 + $0x30] sm:$0xff]
  %v44 = vld [vmem:[%s0 + $0x38] sm:$0xff]
  %v45 = vld [vmem:[%s2] sm:$0xff]
  %v46 = vld [vmem:[%s2 + $0x8] sm:$0xff]
  %v47 = vld [vmem:[%s2 + $0x10] sm:$0xff]
  %v48 = vld [vmem:[%s2 + $0x18] sm:$0xff]
  %v49 = vld [vmem:[%s2 + $0x20] sm:$0xff]
  %v50 = vld [vmem:[%s2 + $0x28] sm:$0xff]
  %v51 = vld [vmem:[%s2 + $0x30] sm:$0xff]
  %v52 = vld [vmem:[%s2 + $0x38] sm:$0xff]
  %v53 = vld [vmem:[%s2 + $0x40] sm:$0xff]
  %v54 = vld [vmem:[%s2 + $0x48] sm:$0xff]
  %v55 = vld [vmem:[%s2 + $0x50] sm:$0xff]
  %v56 = vld [vmem:[%s2 + $0x58] sm:$0xff]
  %v57 = vld [vmem:[%s2 + $0x60] sm:$0xff]
  %v58 = vld [vmem:[%s2 + $0x68] sm:$0xff]
  %v59 = vld [vmem:[%s2 + $0x70] sm:$0xff]
  %v60 = vld [vmem:[%s2 + $0x78] sm:$0xff]
  %v61 = vld [vmem:[%s2 + $0x80] sm:$0xff]
  %v62 = vld [vmem:[%s2 + $0x88] sm:$0xff]
  %v63 = vld [vmem:[%s2 + $0x90] sm:$0xff]
  %v64 = vld [vmem:[%s2 + $0x98] sm:$0xff]
  %v65 = vld [vmem:[%s2 + $0xa0] sm:$0xff]
  %v66 = vld [vmem:[%s2 + $0xa8] sm:$0xff]
  %v67 = vld [vmem:[%s2 + $0xb0] sm:$0xff]
  %v68 = vld [vmem:[%s2 + $0xb8] sm:$0xff]
  %v69 = vld [vmem:[%s2 + $0xc0] sm:$0xff]
  %v70 = vld [vmem:[%s2 + $0xc8] sm:$0xff]
  %v71 = vld [vmem:[%s2 + $0xd0] sm:$0xff]
  %v72 = vld [vmem:[%s2 + $0xd8] sm:$0xff]
  %v73 = vld [vmem:[%s2 + $0xe0] sm:$0xff]
  %v74 = vld [vmem:[%s2 + $0xe8] sm:$0xff]
  %v75 = vld [vmem:[%s2 + $0xf0] sm:$0xff]
  %v76 = vld [vmem:[%s2 + $0xf8] sm:$0xff]
  %v77 = vld [vmem:[%s2 + $0x100] sm:$0xff]
  %v78 = vld [vmem:[%s2 + $0x108] sm:$0xff]
  %v79 = vld [vmem:[%s2 + $0x110] sm:$0xff]
  %v80 = vld [vmem:[%s2 + $0x118] sm:$0xff]
  %v81 = vld [vmem:[%s2 + $0x120] sm:$0xff]
  %v82 = vld [vmem:[%s2 + $0x128] sm:$0xff]
  %v83 = vld [vmem:[%s2 + $0x130] sm:$0xff]
  %v84 = vld [vmem:[%s2 + $0x138] sm:$0xff]
  %v85 = vld [vmem:[%s2 + $0x140] sm:$0xff]
  %v86 = vld [vmem:[%s2 + $0x148] sm:$0xff]
  %v87 = vld [vmem:[%s2 + $0x150] sm:$0xff]
  %v88 = vld [vmem:[%s2 + $0x158] sm:$0xff]
  %v89 = vld [vmem:[%s2 + $0x160] sm:$0xff]
  %v90 = vld [vmem:[%s2 + $0x168] sm:$0xff]
  %v91 = vld [vmem:[%s2 + $0x170] sm:$0xff]
  %v92 = vld [vmem:[%s2 + $0x178] sm:$0xff]
  %v93 = vld [vmem:[%s4] sm:$0x7]
  %v95 = vlaneseq
  %v96 = vshrl.u32 %v95, 7
  %v97 = vsub.s32 0, %v96
  %v98 = vrot.slane %v93, %v97
  %v99 = vlaneseq
  %v100 = vshrl.u32 %v99, 7
  %v101 = vsub.s32 1, %v100
  %v102 = vrot.slane %v93, %v101
  %v103 = vlaneseq
  %v104 = vshrl.u32 %v103, 7
  %v105 = vsub.s32 2, %v104
  %v106 = vrot.slane %v93, %v105
  %110 = vmatprep.subr.mxu0 %v46
  %111 = vmatpush1.msra.mxu0 %v45
  %112 = vmatprep.subr.mxu0 %v49
  %113 = vmatpush1.msra.mxu0 %v48
  %114 = vmatprep.subr.mxu0 %v52
  %115 = vmatpush1.msra.mxu0 %v51
  %116 = vmatprep.subr.mxu0 %v55
  %117 = vmatpush1.msra.mxu0 %v54
  %118 = vmatprep.subr.mxu0 %v58
  %119 = vmatpush1.msra.mxu0 %v57
  %120 = vmatprep.subr.mxu0 %v61
  %121 = vmatpush1.msra.mxu0 %v60
  %122 = vmatprep.subr.mxu0 %v64
  %123 = vmatpush1.msra.mxu0 %v63
  %124 = vmatprep.subr.mxu0 %v67
  %125 = vmatpush1.msra.mxu0 %v66
  %126 = vmatprep.subr.mxu0 %v70
  %127 = vmatpush1.msra.mxu0 %v69
  %128 = vmatprep.subr.mxu0 %v73
  %129 = vmatpush1.msra.mxu0 %v72
  %130 = vmatprep.subr.mxu0 %v76
  %131 = vmatpush1.msra.mxu0 %v75
  %132 = vmatprep.subr.mxu0 %v79
  %133 = vmatpush1.msra.mxu0 %v78
  %134 = vmatprep.subr.mxu0 %v82
  %135 = vmatpush1.msra.mxu0 %v81
  %136 = vmatprep.subr.mxu0 %v85
  %137 = vmatpush1.msra.mxu0 %v84
  %138 = vmatprep.subr.mxu0 %v88
  %139 = vmatpush1.msra.mxu0 %v87
  %140 = vmatprep.subr.mxu0 %v91
  %141 = vmatpush1.msra.mxu0 %v90
  %142 = vmatprep.subr.mxu0 0.0
  %143 = vmatpush1.msra.mxu0 0.0
  %144 = vmatprep.subr.mxu0 0.0
  %145 = vmatpush1.msra.mxu0 0.0
  %146 = vmatprep.subr.mxu0 0.0
  %147 = vmatpush1.msra.mxu0 0.0
  %148 = vmatprep.subr.mxu0 0.0
  %149 = vmatpush1.msra.mxu0 0.0
  %150 = vmatprep.subr.mxu0 0.0
  %151 = vmatpush1.msra.mxu0 0.0
  %152 = vmatprep.subr.mxu0 0.0
  %153 = vmatpush1.msra.mxu0 0.0
  %154 = vmatprep.subr.mxu0 0.0
  %155 = vmatpush1.msra.mxu0 0.0
  %156 = vmatprep.subr.mxu0 0.0
  %157 = vmatpush1.msra.mxu0 0.0
  %158 = vmatprep.subr.mxu0 0.0
  %159 = vmatpush1.msra.mxu0 0.0
  %160 = vmatprep.subr.mxu0 0.0
  %161 = vmatpush1.msra.mxu0 0.0
  %162 = vmatprep.subr.mxu0 0.0
  %163 = vmatpush1.msra.mxu0 0.0
  %164 = vmatprep.subr.mxu0 0.0
  %165 = vmatpush1.msra.mxu0 0.0
  %166 = vmatprep.subr.mxu0 0.0
  %167 = vmatpush1.msra.mxu0 0.0
  %168 = vmatprep.subr.mxu0 0.0
  %169 = vmatpush1.msra.mxu0 0.0
  %170 = vmatprep.subr.mxu0 0.0
  %171 = vmatpush1.msra.mxu0 0.0
  %172 = vmatprep.subr.mxu0 0.0
  %173 = vmatpush1.msra.mxu0 0.0
  %174 = vmatprep.mubr.f32.mxu0 0.0
  %175 = vmatmul.mubr.f32.gmra.mrb[0].mxu0 %v37
  %v176 = vpop.f32.mrb[0].mxu0
  %v177 = vadd.f32 %v98, %v176
  %v178 = vpop.f32.mrb[0].mxu0
  %v179 = vadd.f32 %v102, %v178
  %180 = vmatprep.mubr.f32.mxu0 0.0
  %181 = vmatmul.mubr.f32.gmra.mrb[0].mxu0 %v38
  %v182 = vpop.f32.mrb[0].mxu0
  %v183 = vadd.f32 %v98, %v182
  %v184 = vpop.f32.mrb[0].mxu0
  %v185 = vadd.f32 %v102, %v184
  %186 = vmatprep.mubr.f32.mxu0 0.0
  %187 = vmatmul.mubr.f32.gmra.mrb[0].mxu0 %v39
  %v188 = vpop.f32.mrb[0].mxu0
  %v189 = vadd.f32 %v98, %v188
  %v190 = vpop.f32.mrb[0].mxu0
  %v191 = vadd.f32 %v102, %v190
  %192 = vmatprep.mubr.f32.mxu0 0.0
  %193 = vmatmul.mubr.f32.gmra.mrb[0].mxu0 %v40
  %v194 = vpop.f32.mrb[0].mxu0
  %v195 = vadd.f32 %v98, %v194
  %v196 = vpop.f32.mrb[0].mxu0
  %v197 = vadd.f32 %v102, %v196
  %198 = vmatprep.mubr.f32.mxu0 0.0
  %199 = vmatmul.mubr.f32.gmra.mrb[0].mxu0 %v41
  %v200 = vpop.f32.mrb[0].mxu0
  %v201 = vadd.f32 %v98, %v200
  %v202 = vpop.f32.mrb[0].mxu0
  %v203 = vadd.f32 %v102, %v202
  %204 = vmatprep.mubr.f32.mxu0 0.0
  %205 = vmatmul.mubr.f32.gmra.mrb[0].mxu0 %v42
  %v206 = vpop.f32.mrb[0].mxu0
  %v207 = vadd.f32 %v98, %v206
  %v208 = vpop.f32.mrb[0].mxu0
  %v209 = vadd.f32 %v102, %v208
  %210 = vmatprep.mubr.f32.mxu0 0.0
  %211 = vmatmul.mubr.f32.gmra.mrb[0].mxu0 %v43
  %v212 = vpop.f32.mrb[0].mxu0
  %v213 = vadd.f32 %v98, %v212
  %v214 = vpop.f32.mrb[0].mxu0
  %v215 = vadd.f32 %v102, %v214
  %216 = vmatprep.mubr.f32.mxu0 0.0
  %217 = vmatmul.mubr.f32.gmra.mrb[0].mxu0 %v44
  %v218 = vpop.f32.mrb[0].mxu0
  %v219 = vadd.f32 %v98, %v218
  %v220 = vpop.f32.mrb[0].mxu0
  %v221 = vadd.f32 %v102, %v220
  %222 = vdwg.mxu0
  %223 = vmatprep.subr.mxu0 0.0
  %224 = vmatpush1.msra.mxu0 %v47
  %225 = vmatprep.subr.mxu0 0.0
  %226 = vmatpush1.msra.mxu0 %v50
  %227 = vmatprep.subr.mxu0 0.0
  %228 = vmatpush1.msra.mxu0 %v53
  %229 = vmatprep.subr.mxu0 0.0
  %230 = vmatpush1.msra.mxu0 %v56
  %231 = vmatprep.subr.mxu0 0.0
  %232 = vmatpush1.msra.mxu0 %v59
  %233 = vmatprep.subr.mxu0 0.0
  %234 = vmatpush1.msra.mxu0 %v62
  %235 = vmatprep.subr.mxu0 0.0
  %236 = vmatpush1.msra.mxu0 %v65
  %237 = vmatprep.subr.mxu0 0.0
  %238 = vmatpush1.msra.mxu0 %v68
  %239 = vmatprep.subr.mxu0 0.0
  %240 = vmatpush1.msra.mxu0 %v71
  %241 = vmatprep.subr.mxu0 0.0
  %242 = vmatpush1.msra.mxu0 %v74
  %243 = vmatprep.subr.mxu0 0.0
  %244 = vmatpush1.msra.mxu0 %v77
  %245 = vmatprep.subr.mxu0 0.0
  %246 = vmatpush1.msra.mxu0 %v80
  %247 = vmatprep.subr.mxu0 0.0
  %248 = vmatpush1.msra.mxu0 %v83
  %249 = vmatprep.subr.mxu0 0.0
  %250 = vmatpush1.msra.mxu0 %v86
  %251 = vmatprep.subr.mxu0 0.0
  %252 = vmatpush1.msra.mxu0 %v89
  %253 = vmatprep.subr.mxu0 0.0
  %254 = vmatpush1.msra.mxu0 %v92
  %255 = vmatprep.subr.mxu0 0.0
  %256 = vmatpush1.msra.mxu0 0.0
  %257 = vmatprep.subr.mxu0 0.0
  %258 = vmatpush1.msra.mxu0 0.0
  %259 = vmatprep.subr.mxu0 0.0
  %260 = vmatpush1.msra.mxu0 0.0
  %261 = vmatprep.subr.mxu0 0.0
  %262 = vmatpush1.msra.mxu0 0.0
  %263 = vmatprep.subr.mxu0 0.0
  %264 = vmatpush1.msra.mxu0 0.0
  %265 = vmatprep.subr.mxu0 0.0
  %266 = vmatpush1.msra.mxu0 0.0
  %267 = vmatprep.subr.mxu0 0.0
  %268 = vmatpush1.msra.mxu0 0.0
  %269 = vmatprep.subr.mxu0 0.0
  %270 = vmatpush1.msra.mxu0 0.0
  %271 = vmatprep.subr.mxu0 0.0
  %272 = vmatpush1.msra.mxu0 0.0
  %273 = vmatprep.subr.mxu0 0.0
  %274 = vmatpush1.msra.mxu0 0.0
  %275 = vmatprep.subr.mxu0 0.0
  %276 = vmatpush1.msra.mxu0 0.0
  %277 = vmatprep.subr.mxu0 0.0
  %278 = vmatpush1.msra.mxu0 0.0
  %279 = vmatprep.subr.mxu0 0.0
  %280 = vmatpush1.msra.mxu0 0.0
  %281 = vmatprep.subr.mxu0 0.0
  %282 = vmatpush1.msra.mxu0 0.0
  %283 = vmatprep.subr.mxu0 0.0
  %284 = vmatpush1.msra.mxu0 0.0
  %285 = vmatprep.subr.mxu0 0.0
  %286 = vmatpush1.msra.mxu0 0.0
  %287 = vmatprep.mubr.f32.mxu0 0.0
  %288 = vmatmul.mubr.f32.gmra.mrb[0].mxu0 %v37
  %v289 = vpop.f32.mrb[0].mxu0
  %v290 = vadd.f32 %v106, %v289
  %v291 = vpop.f32.mrb[0].mxu0
  %292 = vmatprep.mubr.f32.mxu0 0.0
  %293 = vmatmul.mubr.f32.gmra.mrb[0].mxu0 %v38
  %v294 = vpop.f32.mrb[0].mxu0
  %v295 = vadd.f32 %v106, %v294
  %v296 = vpop.f32.mrb[0].mxu0
  %297 = vmatprep.mubr.f32.mxu0 0.0
  %298 = vmatmul.mubr.f32.gmra.mrb[0].mxu0 %v39
  %v299 = vpop.f32.mrb[0].mxu0
  %v300 = vadd.f32 %v106, %v299
  %v301 = vpop.f32.mrb[0].mxu0
  %302 = vmatprep.mubr.f32.mxu0 0.0
  %303 = vmatmul.mubr.f32.gmra.mrb[0].mxu0 %v40
  %v304 = vpop.f32.mrb[0].mxu0
  %v305 = vadd.f32 %v106, %v304
  %v306 = vpop.f32.mrb[0].mxu0
  %307 = vmatprep.mubr.f32.mxu0 0.0
  %308 = vmatmul.mubr.f32.gmra.mrb[0].mxu0 %v41
  %v309 = vpop.f32.mrb[0].mxu0
  %v310 = vadd.f32 %v106, %v309
  %v311 = vpop.f32.mrb[0].mxu0
  %312 = vmatprep.mubr.f32.mxu0 0.0
  %313 = vmatmul.mubr.f32.gmra.mrb[0].mxu0 %v42
  %v314 = vpop.f32.mrb[0].mxu0
  %v315 = vadd.f32 %v106, %v314
  %v316 = vpop.f32.mrb[0].mxu0
  %317 = vmatprep.mubr.f32.mxu0 0.0
  %318 = vmatmul.mubr.f32.gmra.mrb[0].mxu0 %v43
  %v319 = vpop.f32.mrb[0].mxu0
  %v320 = vadd.f32 %v106, %v319
  %v321 = vpop.f32.mrb[0].mxu0
  %322 = vmatprep.mubr.f32.mxu0 0.0
  %323 = vmatmul.mubr.f32.gmra.mrb[0].mxu0 %v44
  %v324 = vpop.f32.mrb[0].mxu0
  %v325 = vadd.f32 %v106, %v324
  %v326 = vpop.f32.mrb[0].mxu0
  %327 = vdwg.mxu0
  %328 = vst [vmem:[#allocation3] sm:$0xff] %v177
  %329 = vst [vmem:[#allocation3 + $0x8] sm:$0xff] %v179
  %330 = vst [vmem:[#allocation3 + $0x10] sm:$0xff] %v290
  %331 = vst [vmem:[#allocation3 + $0x18] sm:$0xff] %v183
  %332 = vst [vmem:[#allocation3 + $0x20] sm:$0xff] %v185
  %333 = vst [vmem:[#allocation3 + $0x28] sm:$0xff] %v295
  %334 = vst [vmem:[#allocation3 + $0x30] sm:$0xff] %v189
  %335 = vst [vmem:[#allocation3 + $0x38] sm:$0xff] %v191
  %336 = vst [vmem:[#allocation3 + $0x40] sm:$0xff] %v300
  %337 = vst [vmem:[#allocation3 + $0x48] sm:$0xff] %v195
  %338 = vst [vmem:[#allocation3 + $0x50] sm:$0xff] %v197
  %339 = vst [vmem:[#allocation3 + $0x58] sm:$0xff] %v305
  %340 = vst [vmem:[#allocation3 + $0x60] sm:$0xff] %v201
  %341 = vst [vmem:[#allocation3 + $0x68] sm:$0xff] %v203
  %342 = vst [vmem:[#allocation3 + $0x70] sm:$0xff] %v310
  %343 = vst [vmem:[#allocation3 + $0x78] sm:$0xff] %v207
  %344 = vst [vmem:[#allocation3 + $0x80] sm:$0xff] %v209
  %345 = vst [vmem:[#allocation3 + $0x88] sm:$0xff] %v315
  %346 = vst [vmem:[#allocation3 + $0x90] sm:$0xff] %v213
  %347 = vst [vmem:[#allocation3 + $0x98] sm:$0xff] %v215
  %348 = vst [vmem:[#allocation3 + $0xa0] sm:$0xff] %v320
  %349 = vst [vmem:[#allocation3 + $0xa8] sm:$0xff] %v219
  %350 = vst [vmem:[#allocation3 + $0xb0] sm:$0xff] %v221
  %351 = vst [vmem:[#allocation3 + $0xb8] sm:$0xff] %v325
  %v352 = vld [vmem:[#allocation2] sm:$0xff]
  %v353 = vld [vmem:[#allocation3] sm:$0xff]
  %v354 = vld [vmem:[#allocation3 + $0x8] sm:$0xff]
  %v355 = vld [vmem:[#allocation3 + $0x10] sm:$0xff]
  %v356 = vld [vmem:[%s3] sm:$0xff]
  %v357 = vld [vmem:[%s3 + $0x8] sm:$0xff]
  %v358 = vld [vmem:[%s3 + $0x10] sm:$0xff]
  %v359 = vld [vmem:[%s3 + $0x18] sm:$0xff]
  %v360 = vld [vmem:[%s3 + $0x20] sm:$0xff]
  %v361 = vld [vmem:[%s3 + $0x28] sm:$0xff]
  %v362 = vld [vmem:[%s3 + $0x30] sm:$0xff]
  %v363 = vld [vmem:[%s3 + $0x38] sm:$0xff]
  %v364 = vld [vmem:[%s3 + $0x40] sm:$0xff]
  %v365 = vld [vmem:[%s3 + $0x48] sm:$0xff]
  %v366 = vld [vmem:[%s3 + $0x50] sm:$0xff]
  %v367 = vld [vmem:[%s3 + $0x58] sm:$0xff]
  %v368 = vld [vmem:[%s3 + $0x60] sm:$0xff]
  %v369 = vld [vmem:[%s3 + $0x68] sm:$0xff]
  %v370 = vld [vmem:[%s3 + $0x70] sm:$0xff]
  %v371 = vld [vmem:[%s3 + $0x78] sm:$0xff]
  %v372 = vld [vmem:[%s3 + $0x80] sm:$0xff]
  %v373 = vld [vmem:[%s3 + $0x88] sm:$0xff]
  %v374 = vld [vmem:[%s3 + $0x90] sm:$0xff]
  %v375 = vld [vmem:[%s3 + $0x98] sm:$0xff]
  %v376 = vld [vmem:[%s3 + $0xa0] sm:$0xff]
  %v377 = vld [vmem:[%s3 + $0xa8] sm:$0xff]
  %v378 = vld [vmem:[%s3 + $0xb0] sm:$0xff]
  %v379 = vld [vmem:[%s3 + $0xb8] sm:$0xff]
  %v380 = vld [vmem:[%s3 + $0xc0] sm:$0xff]
  %v381 = vld [vmem:[%s3 + $0xc8] sm:$0xff]
  %v382 = vld [vmem:[%s3 + $0xd0] sm:$0xff]
  %v383 = vld [vmem:[%s3 + $0xd8] sm:$0xff]
  %v384 = vld [vmem:[%s3 + $0xe0] sm:$0xff]
  %v385 = vld [vmem:[%s3 + $0xe8] sm:$0xff]
  %v386 = vld [vmem:[%s3 + $0xf0] sm:$0xff]
  %v387 = vld [vmem:[%s3 + $0xf8] sm:$0xff]
  %v388 = vld [vmem:[%s3 + $0x100] sm:$0xff]
  %v389 = vld [vmem:[%s3 + $0x108] sm:$0xff]
  %v390 = vld [vmem:[%s3 + $0x110] sm:$0xff]
  %v391 = vld [vmem:[%s3 + $0x118] sm:$0xff]
  %v392 = vld [vmem:[%s3 + $0x120] sm:$0xff]
  %v393 = vld [vmem:[%s3 + $0x128] sm:$0xff]
  %v394 = vld [vmem:[%s3 + $0x130] sm:$0xff]
  %v395 = vld [vmem:[%s3 + $0x138] sm:$0xff]
  %v396 = vld [vmem:[%s3 + $0x140] sm:$0xff]
  %v397 = vld [vmem:[%s3 + $0x148] sm:$0xff]
  %v398 = vld [vmem:[%s3 + $0x150] sm:$0xff]
  %v399 = vld [vmem:[%s3 + $0x158] sm:$0xff]
  %v400 = vld [vmem:[%s3 + $0x160] sm:$0xff]
  %v401 = vld [vmem:[%s3 + $0x168] sm:$0xff]
  %v402 = vld [vmem:[%s3 + $0x170] sm:$0xff]
  %v403 = vld [vmem:[%s3 + $0x178] sm:$0xff]
  %v404 = vld [vmem:[%s5] sm:$0x7]
  %v406 = vlaneseq
  %v407 = vshrl.u32 %v406, 7
  %v408 = vsub.s32 0, %v407
  %v409 = vrot.slane %v404, %v408
  %v410 = vlaneseq
  %v411 = vshrl.u32 %v410, 7
  %v412 = vsub.s32 1, %v411
  %v413 = vrot.slane %v404, %v412
  %v414 = vlaneseq
  %v415 = vshrl.u32 %v414, 7
  %v416 = vsub.s32 2, %v415
  %v417 = vrot.slane %v404, %v416
  %421 = vmatprep.subr.mxu0 %v357
  %422 = vmatpush1.msra.mxu0 %v356
  %423 = vmatprep.subr.mxu0 %v360
  %424 = vmatpush1.msra.mxu0 %v359
  %425 = vmatprep.subr.mxu0 %v363
  %426 = vmatpush1.msra.mxu0 %v362
  %427 = vmatprep.subr.mxu0 %v366
  %428 = vmatpush1.msra.mxu0 %v365
  %429 = vmatprep.subr.mxu0 %v369
  %430 = vmatpush1.msra.mxu0 %v368
  %431 = vmatprep.subr.mxu0 %v372
  %432 = vmatpush1.msra.mxu0 %v371
  %433 = vmatprep.subr.mxu0 %v375
  %434 = vmatpush1.msra.mxu0 %v374
  %435 = vmatprep.subr.mxu0 %v378
  %436 = vmatpush1.msra.mxu0 %v377
  %437 = vmatprep.subr.mxu0 %v381
  %438 = vmatpush1.msra.mxu0 %v380
  %439 = vmatprep.subr.mxu0 %v384
  %440 = vmatpush1.msra.mxu0 %v383
  %441 = vmatprep.subr.mxu0 %v387
  %442 = vmatpush1.msra.mxu0 %v386
  %443 = vmatprep.subr.mxu0 %v390
  %444 = vmatpush1.msra.mxu0 %v389
  %445 = vmatprep.subr.mxu0 %v393
  %446 = vmatpush1.msra.mxu0 %v392
  %447 = vmatprep.subr.mxu0 %v396
  %448 = vmatpush1.msra.mxu0 %v395
  %449 = vmatprep.subr.mxu0 %v399
  %450 = vmatpush1.msra.mxu0 %v398
  %451 = vmatprep.subr.mxu0 %v402
  %452 = vmatpush1.msra.mxu0 %v401
  %453 = vmatprep.subr.mxu0 0.0
  %454 = vmatpush1.msra.mxu0 0.0
  %455 = vmatprep.subr.mxu0 0.0
  %456 = vmatpush1.msra.mxu0 0.0
  %457 = vmatprep.subr.mxu0 0.0
  %458 = vmatpush1.msra.mxu0 0.0
  %459 = vmatprep.subr.mxu0 0.0
  %460 = vmatpush1.msra.mxu0 0.0
  %461 = vmatprep.subr.mxu0 0.0
  %462 = vmatpush1.msra.mxu0 0.0
  %463 = vmatprep.subr.mxu0 0.0
  %464 = vmatpush1.msra.mxu0 0.0
  %465 = vmatprep.subr.mxu0 0.0
  %466 = vmatpush1.msra.mxu0 0.0
  %467 = vmatprep.subr.mxu0 0.0
  %468 = vmatpush1.msra.mxu0 0.0
  %469 = vmatprep.subr.mxu0 0.0
  %470 = vmatpush1.msra.mxu0 0.0
  %471 = vmatprep.subr.mxu0 0.0
  %472 = vmatpush1.msra.mxu0 0.0
  %473 = vmatprep.subr.mxu0 0.0
  %474 = vmatpush1.msra.mxu0 0.0
  %475 = vmatprep.subr.mxu0 0.0
  %476 = vmatpush1.msra.mxu0 0.0
  %477 = vmatprep.subr.mxu0 0.0
  %478 = vmatpush1.msra.mxu0 0.0
  %479 = vmatprep.subr.mxu0 0.0
  %480 = vmatpush1.msra.mxu0 0.0
  %481 = vmatprep.subr.mxu0 0.0
  %482 = vmatpush1.msra.mxu0 0.0
  %483 = vmatprep.subr.mxu0 0.0
  %484 = vmatpush1.msra.mxu0 0.0
  %485 = vmatprep.mubr.f32.mxu0 0.0
  %486 = vmatmul.mubr.f32.gmra.mrb[0].mxu0 %v352
  %v487 = vpop.f32.mrb[0].mxu0
  %v488 = vadd.f32 %v409, %v487
  %v489 = vpop.f32.mrb[0].mxu0
  %v490 = vadd.f32 %v413, %v489
  %491 = vdwg.mxu0
  %492 = vmatprep.subr.mxu0 0.0
  %493 = vmatpush1.msra.mxu0 %v358
  %494 = vmatprep.subr.mxu0 0.0
  %495 = vmatpush1.msra.mxu0 %v361
  %496 = vmatprep.subr.mxu0 0.0
  %497 = vmatpush1.msra.mxu0 %v364
  %498 = vmatprep.subr.mxu0 0.0
  %499 = vmatpush1.msra.mxu0 %v367
  %500 = vmatprep.subr.mxu0 0.0
  %501 = vmatpush1.msra.mxu0 %v370
  %502 = vmatprep.subr.mxu0 0.0
  %503 = vmatpush1.msra.mxu0 %v373
  %504 = vmatprep.subr.mxu0 0.0
  %505 = vmatpush1.msra.mxu0 %v376
  %506 = vmatprep.subr.mxu0 0.0
  %507 = vmatpush1.msra.mxu0 %v379
  %508 = vmatprep.subr.mxu0 0.0
  %509 = vmatpush1.msra.mxu0 %v382
  %510 = vmatprep.subr.mxu0 0.0
  %511 = vmatpush1.msra.mxu0 %v385
  %512 = vmatprep.subr.mxu0 0.0
  %513 = vmatpush1.msra.mxu0 %v388
  %514 = vmatprep.subr.mxu0 0.0
  %515 = vmatpush1.msra.mxu0 %v391
  %516 = vmatprep.subr.mxu0 0.0
  %517 = vmatpush1.msra.mxu0 %v394
  %518 = vmatprep.subr.mxu0 0.0
  %519 = vmatpush1.msra.mxu0 %v397
  %520 = vmatprep.subr.mxu0 0.0
  %521 = vmatpush1.msra.mxu0 %v400
  %522 = vmatprep.subr.mxu0 0.0
  %523 = vmatpush1.msra.mxu0 %v403
  %524 = vmatprep.subr.mxu0 0.0
  %525 = vmatpush1.msra.mxu0 0.0
  %526 = vmatprep.subr.mxu0 0.0
  %527 = vmatpush1.msra.mxu0 0.0
  %528 = vmatprep.subr.mxu0 0.0
  %529 = vmatpush1.msra.mxu0 0.0
  %530 = vmatprep.subr.mxu0 0.0
  %531 = vmatpush1.msra.mxu0 0.0
  %532 = vmatprep.subr.mxu0 0.0
  %533 = vmatpush1.msra.mxu0 0.0
  %534 = vmatprep.subr.mxu0 0.0
  %535 = vmatpush1.msra.mxu0 0.0
  %536 = vmatprep.subr.mxu0 0.0
  %537 = vmatpush1.msra.mxu0 0.0
  %538 = vmatprep.subr.mxu0 0.0
  %539 = vmatpush1.msra.mxu0 0.0
  %540 = vmatprep.subr.mxu0 0.0
  %541 = vmatpush1.msra.mxu0 0.0
  %542 = vmatprep.subr.mxu0 0.0
  %543 = vmatpush1.msra.mxu0 0.0
  %544 = vmatprep.subr.mxu0 0.0
  %545 = vmatpush1.msra.mxu0 0.0
  %546 = vmatprep.subr.mxu0 0.0
  %547 = vmatpush1.msra.mxu0 0.0
  %548 = vmatprep.subr.mxu0 0.0
  %549 = vmatpush1.msra.mxu0 0.0
  %550 = vmatprep.subr.mxu0 0.0
  %551 = vmatpush1.msra.mxu0 0.0
  %552 = vmatprep.subr.mxu0 0.0
  %553 = vmatpush1.msra.mxu0 0.0
  %554 = vmatprep.subr.mxu0 0.0
  %555 = vmatpush1.msra.mxu0 0.0
  %556 = vmatprep.mubr.f32.mxu0 0.0
  %557 = vmatmul.mubr.f32.gmra.mrb[0].mxu0 %v352
  %v558 = vpop.f32.mrb[0].mxu0
  %v559 = vadd.f32 %v417, %v558
  %v560 = vpop.f32.mrb[0].mxu0
  %561 = vdwg.mxu0
  %v562 = vadd.f32 %v353, %v488
  %v563 = vxor.u32 %v562, 2147483648
  %v564 = vmul.f32 %v563, 1.442695
  %v565 = vpow.pop %v564
  %v566 = vadd.f32 %v565, 1.0
  %v567 = vrcp.pop %v566
  %v568 = vmul.f32 1.0, %v567
  %v569 = vadd.f32 %v354, %v490
  %v570 = vxor.u32 %v569, 2147483648
  %v571 = vmul.f32 %v570, 1.442695
  %v572 = vpow.pop %v571
  %v573 = vadd.f32 %v572, 1.0
  %v574 = vrcp.pop %v573
  %v575 = vmul.f32 1.0, %v574
  %v576 = vmul.f32 %v568, %v559
  %v577 = vadd.f32 %v355, %v576
  %v578 = vtanh.pop %v577
  %v579 = vsub.f32 1.0, %v575
  %v580 = vmul.f32 %v579, %v578
  %v581 = vmul.f32 %v575, %v352
  %v582 = vadd.f32 %v580, %v581
  %v583 = vld [vmem:[#allocation3 + $0x18] sm:$0xff]
  %v584 = vld [vmem:[#allocation3 + $0x20] sm:$0xff]
  %v585 = vld [vmem:[#allocation3 + $0x28] sm:$0xff]
  %586 = vmatprep.subr.mxu0 %v357
  %587 = vmatpush1.msra.mxu0 %v356
  %588 = vmatprep.subr.mxu0 %v360
  %589 = vmatpush1.msra.mxu0 %v359
  %590 = vmatprep.subr.mxu0 %v363
  %591 = vmatpush1.msra.mxu0 %v362
  %592 = vmatprep.subr.mxu0 %v366
  %593 = vmatpush1.msra.mxu0 %v365
  %594 = vmatprep.subr.mxu0 %v369
  %595 = vmatpush1.msra.mxu0 %v368
  %596 = vmatprep.subr.mxu0 %v372
  %597 = vmatpush1.msra.mxu0 %v371
  %598 = vmatprep.subr.mxu0 %v375
  %599 = vmatpush1.msra.mxu0 %v374
  %600 = vmatprep.subr.mxu0 %v378
  %601 = vmatpush1.msra.mxu0 %v377
  %602 = vmatprep.subr.mxu0 %v381
  %603 = vmatpush1.msra.mxu0 %v380
  %604 = vmatprep.subr.mxu0 %v384
  %605 = vmatpush1.msra.mxu0 %v383
  %606 = vmatprep.subr.mxu0 %v387
  %607 = vmatpush1.msra.mxu0 %v386
  %608 = vmatprep.subr.mxu0 %v390
  %609 = vmatpush1.msra.mxu0 %v389
  %610 = vmatprep.subr.mxu0 %v393
  %611 = vmatpush1.msra.mxu0 %v392
  %612 = vmatprep.subr.mxu0 %v396
  %613 = vmatpush1.msra.mxu0 %v395
  %614 = vmatprep.subr.mxu0 %v399
  %615 = vmatpush1.msra.mxu0 %v398
  %616 = vmatprep.subr.mxu0 %v402
  %617 = vmatpush1.msra.mxu0 %v401
  %618 = vmatprep.subr.mxu0 0.0
  %619 = vmatpush1.msra.mxu0 0.0
  %620 = vmatprep.subr.mxu0 0.0
  %621 = vmatpush1.msra.mxu0 0.0
  %622 = vmatprep.subr.mxu0 0.0
  %623 = vmatpush1.msra.mxu0 0.0
  %624 = vmatprep.subr.mxu0 0.0
  %625 = vmatpush1.msra.mxu0 0.0
  %626 = vmatprep.subr.mxu0 0.0
  %627 = vmatpush1.msra.mxu0 0.0
  %628 = vmatprep.subr.mxu0 0.0
  %629 = vmatpush1.msra.mxu0 0.0
  %630 = vmatprep.subr.mxu0 0.0
  %631 = vmatpush1.msra.mxu0 0.0
  %632 = vmatprep.subr.mxu0 0.0
  %633 = vmatpush1.msra.mxu0 0.0
  %634 = vmatprep.subr.mxu0 0.0
  %635 = vmatpush1.msra.mxu0 0.0
  %636 = vmatprep.subr.mxu0 0.0
  %637 = vmatpush1.msra.mxu0 0.0
  %638 = vmatprep.subr.mxu0 0.0
  %639 = vmatpush1.msra.mxu0 0.0
  %640 = vmatprep.subr.mxu0 0.0
  %641 = vmatpush1.msra.mxu0 0.0
  %642 = vmatprep.subr.mxu0 0.0
  %643 = vmatpush1.msra.mxu0 0.0
  %644 = vmatprep.subr.mxu0 0.0
  %645 = vmatpush1.msra.mxu0 0.0
  %646 = vmatprep.subr.mxu0 0.0
  %647 = vmatpush1.msra.mxu0 0.0
  %648 = vmatprep.subr.mxu0 0.0
  %649 = vmatpush1.msra.mxu0 0.0
  %650 = vmatprep.mubr.f32.mxu0 0.0
  %651 = vmatmul.mubr.f32.gmra.mrb[0].mxu0 %v582
  %v652 = vpop.f32.mrb[0].mxu0
  %v653 = vadd.f32 %v409, %v652
  %v654 = vpop.f32.mrb[0].mxu0
  %v655 = vadd.f32 %v413, %v654
  %656 = vdwg.mxu0
  %657 = vmatprep.subr.mxu0 0.0
  %658 = vmatpush1.msra.mxu0 %v358
  %659 = vmatprep.subr.mxu0 0.0
  %660 = vmatpush1.msra.mxu0 %v361
  %661 = vmatprep.subr.mxu0 0.0
  %662 = vmatpush1.msra.mxu0 %v364
  %663 = vmatprep.subr.mxu0 0.0
  %664 = vmatpush1.msra.mxu0 %v367
  %665 = vmatprep.subr.mxu0 0.0
  %666 = vmatpush1.msra.mxu0 %v370
  %667 = vmatprep.subr.mxu0 0.0
  %668 = vmatpush1.msra.mxu0 %v373
  %669 = vmatprep.subr.mxu0 0.0
  %670 = vmatpush1.msra.mxu0 %v376
  %671 = vmatprep.subr.mxu0 0.0
  %672 = vmatpush1.msra.mxu0 %v379
  %673 = vmatprep.subr.mxu0 0.0
  %674 = vmatpush1.msra.mxu0 %v382
  %675 = vmatprep.subr.mxu0 0.0
  %676 = vmatpush1.msra.mxu0 %v385
  %677 = vmatprep.subr.mxu0 0.0
  %678 = vmatpush1.msra.mxu0 %v388
  %679 = vmatprep.subr.mxu0 0.0
  %680 = vmatpush1.msra.mxu0 %v391
  %681 = vmatprep.subr.mxu0 0.0
  %682 = vmatpush1.msra.mxu0 %v394
  %683 = vmatprep.subr.mxu0 0.0
  %684 = vmatpush1.msra.mxu0 %v397
  %685 = vmatprep.subr.mxu0 0.0
  %686 = vmatpush1.msra.mxu0 %v400
  %687 = vmatprep.subr.mxu0 0.0
  %688 = vmatpush1.msra.mxu0 %v403
  %689 = vmatprep.subr.mxu0 0.0
  %690 = vmatpush1.msra.mxu0 0.0
  %691 = vmatprep.subr.mxu0 0.0
  %692 = vmatpush1.msra.mxu0 0.0
  %693 = vmatprep.subr.mxu0 0.0
  %694 = vmatpush1.msra.mxu0 0.0
  %695 = vmatprep.subr.mxu0 0.0
  %696 = vmatpush1.msra.mxu0 0.0
  %697 = vmatprep.subr.mxu0 0.0
  %698 = vmatpush1.msra.mxu0 0.0
  %699 = vmatprep.subr.mxu0 0.0
  %700 = vmatpush1.msra.mxu0 0.0
  %701 = vmatprep.subr.mxu0 0.0
  %702 = vmatpush1.msra.mxu0 0.0
  %703 = vmatprep.subr.mxu0 0.0
  %704 = vmatpush1.msra.mxu0 0.0
  %705 = vmatprep.subr.mxu0 0.0
  %706 = vmatpush1.msra.mxu0 0.0
  %707 = vmatprep.subr.mxu0 0.0
  %708 = vmatpush1.msra.mxu0 0.0
  %709 = vmatprep.subr.mxu0 0.0
  %710 = vmatpush1.msra.mxu0 0.0
  %711 = vmatprep.subr.mxu0 0.0
  %712 = vmatpush1.msra.mxu0 0.0
  %713 = vmatprep.subr.mxu0 0.0
  %714 = vmatpush1.msra.mxu0 0.0
  %715 = vmatprep.subr.mxu0 0.0
  %716 = vmatpush1.msra.mxu0 0.0
  %717 = vmatprep.subr.mxu0 0.0
  %718 = vmatpush1.msra.mxu0 0.0
  %719 = vmatprep.subr.mxu0 0.0
  %720 = vmatpush1.msra.mxu0 0.0
  %721 = vmatprep.mubr.f32.mxu0 0.0
  %722 = vmatmul.mubr.f32.gmra.mrb[0].mxu0 %v582
  %v723 = vpop.f32.mrb[0].mxu0
  %v724 = vadd.f32 %v417, %v723
  %v725 = vpop.f32.mrb[0].mxu0
  %726 = vdwg.mxu0
  %v727 = vadd.f32 %v583, %v653
  %v728 = vxor.u32 %v727, 2147483648
  %v729 = vmul.f32 %v728, 1.442695
  %v730 = vpow.pop %v729
  %v731 = vadd.f32 %v730, 1.0
  %v732 = vrcp.pop %v731
  %v733 = vmul.f32 1.0, %v732
  %v734 = vadd.f32 %v584, %v655
  %v735 = vxor.u32 %v734, 2147483648
  %v736 = vmul.f32 %v735, 1.442695
  %v737 = vpow.pop %v736
  %v738 = vadd.f32 %v737, 1.0
  %v739 = vrcp.pop %v738
  %v740 = vmul.f32 1.0, %v739
  %v741 = vmul.f32 %v733, %v724
  %v742 = vadd.f32 %v585, %v741
  %v743 = vtanh.pop %v742
  %v744 = vsub.f32 1.0, %v740
  %v745 = vmul.f32 %v744, %v743
  %v746 = vmul.f32 %v740, %v582
  %v747 = vadd.f32 %v745, %v746
  %v748 = vld [vmem:[#allocation3 + $0x30] sm:$0xff]
  %v749 = vld [vmem:[#allocation3 + $0x38] sm:$0xff]
  %v750 = vld [vmem:[#allocation3 + $0x40] sm:$0xff]
  %751 = vmatprep.subr.mxu0 %v357
  %752 = vmatpush1.msra.mxu0 %v356
  %753 = vmatprep.subr.mxu0 %v360
  %754 = vmatpush1.msra.mxu0 %v359
  %755 = vmatprep.subr.mxu0 %v363
  %756 = vmatpush1.msra.mxu0 %v362
  %757 = vmatprep.subr.mxu0 %v366
  %758 = vmatpush1.msra.mxu0 %v365
  %759 = vmatprep.subr.mxu0 %v369
  %760 = vmatpush1.msra.mxu0 %v368
  %761 = vmatprep.subr.mxu0 %v372
  %762 = vmatpush1.msra.mxu0 %v371
  %763 = vmatprep.subr.mxu0 %v375
  %764 = vmatpush1.msra.mxu0 %v374
  %765 = vmatprep.subr.mxu0 %v378
  %766 = vmatpush1.msra.mxu0 %v377
  %767 = vmatprep.subr.mxu0 %v381
  %768 = vmatpush1.msra.mxu0 %v380
  %769 = vmatprep.subr.mxu0 %v384
  %770 = vmatpush1.msra.mxu0 %v383
  %771 = vmatprep.subr.mxu0 %v387
  %772 = vmatpush1.msra.mxu0 %v386
  %773 = vmatprep.subr.mxu0 %v390
  %774 = vmatpush1.msra.mxu0 %v389
  %775 = vmatprep.subr.mxu0 %v393
  %776 = vmatpush1.msra.mxu0 %v392
  %777 = vmatprep.subr.mxu0 %v396
  %778 = vmatpush1.msra.mxu0 %v395
  %779 = vmatprep.subr.mxu0 %v399
  %780 = vmatpush1.msra.mxu0 %v398
  %781 = vmatprep.subr.mxu0 %v402
  %782 = vmatpush1.msra.mxu0 %v401
  %783 = vmatprep.subr.mxu0 0.0
  %784 = vmatpush1.msra.mxu0 0.0
  %785 = vmatprep.subr.mxu0 0.0
  %786 = vmatpush1.msra.mxu0 0.0
  %787 = vmatprep.subr.mxu0 0.0
  %788 = vmatpush1.msra.mxu0 0.0
  %789 = vmatprep.subr.mxu0 0.0
  %790 = vmatpush1.msra.mxu0 0.0
  %791 = vmatprep.subr.mxu0 0.0
  %792 = vmatpush1.msra.mxu0 0.0
  %793 = vmatprep.subr.mxu0 0.0
  %794 = vmatpush1.msra.mxu0 0.0
  %795 = vmatprep.subr.mxu0 0.0
  %796 = vmatpush1.msra.mxu0 0.0
  %797 = vmatprep.subr.mxu0 0.0
  %798 = vmatpush1.msra.mxu0 0.0
  %799 = vmatprep.subr.mxu0 0.0
  %800 = vmatpush1.msra.mxu0 0.0
  %801 = vmatprep.subr.mxu0 0.0
  %802 = vmatpush1.msra.mxu0 0.0
  %803 = vmatprep.subr.mxu0 0.0
  %804 = vmatpush1.msra.mxu0 0.0
  %805 = vmatprep.subr.mxu0 0.0
  %806 = vmatpush1.msra.mxu0 0.0
  %807 = vmatprep.subr.mxu0 0.0
  %808 = vmatpush1.msra.mxu0 0.0
  %809 = vmatprep.subr.mxu0 0.0
  %810 = vmatpush1.msra.mxu0 0.0
  %811 = vmatprep.subr.mxu0 0.0
  %812 = vmatpush1.msra.mxu0 0.0
  %813 = vmatprep.subr.mxu0 0.0
  %814 = vmatpush1.msra.mxu0 0.0
  %815 = vmatprep.mubr.f32.mxu0 0.0
  %816 = vmatmul.mubr.f32.gmra.mrb[0].mxu0 %v747
  %v817 = vpop.f32.mrb[0].mxu0
  %v818 = vadd.f32 %v409, %v817
  %v819 = vpop.f32.mrb[0].mxu0
  %v820 = vadd.f32 %v413, %v819
  %821 = vdwg.mxu0
  %822 = vmatprep.subr.mxu0 0.0
  %823 = vmatpush1.msra.mxu0 %v358
  %824 = vmatprep.subr.mxu0 0.0
  %825 = vmatpush1.msra.mxu0 %v361
  %826 = vmatprep.subr.mxu0 0.0
  %827 = vmatpush1.msra.mxu0 %v364
  %828 = vmatprep.subr.mxu0 0.0
  %829 = vmatpush1.msra.mxu0 %v367
  %830 = vmatprep.subr.mxu0 0.0
  %831 = vmatpush1.msra.mxu0 %v370
  %832 = vmatprep.subr.mxu0 0.0
  %833 = vmatpush1.msra.mxu0 %v373
  %834 = vmatprep.subr.mxu0 0.0
  %835 = vmatpush1.msra.mxu0 %v376
  %836 = vmatprep.subr.mxu0 0.0
  %837 = vmatpush1.msra.mxu0 %v379
  %838 = vmatprep.subr.mxu0 0.0
  %839 = vmatpush1.msra.mxu0 %v382
  %840 = vmatprep.subr.mxu0 0.0
  %841 = vmatpush1.msra.mxu0 %v385
  %842 = vmatprep.subr.mxu0 0.0
  %843 = vmatpush1.msra.mxu0 %v388
  %844 = vmatprep.subr.mxu0 0.0
  %845 = vmatpush1.msra.mxu0 %v391
  %846 = vmatprep.subr.mxu0 0.0
  %847 = vmatpush1.msra.mxu0 %v394
  %848 = vmatprep.subr.mxu0 0.0
  %849 = vmatpush1.msra.mxu0 %v397
  %850 = vmatprep.subr.mxu0 0.0
  %851 = vmatpush1.msra.mxu0 %v400
  %852 = vmatprep.subr.mxu0 0.0
  %853 = vmatpush1.msra.mxu0 %v403
  %854 = vmatprep.subr.mxu0 0.0
  %855 = vmatpush1.msra.mxu0 0.0
  %856 = vmatprep.subr.mxu0 0.0
  %857 = vmatpush1.msra.mxu0 0.0
  %858 = vmatprep.subr.mxu0 0.0
  %859 = vmatpush1.msra.mxu0 0.0
  %860 = vmatprep.subr.mxu0 0.0
  %861 = vmatpush1.msra.mxu0 0.0
  %862 = vmatprep.subr.mxu0 0.0
  %863 = vmatpush1.msra.mxu0 0.0
  %864 = vmatprep.subr.mxu0 0.0
  %865 = vmatpush1.msra.mxu0 0.0
  %866 = vmatprep.subr.mxu0 0.0
  %867 = vmatpush1.msra.mxu0 0.0
  %868 = vmatprep.subr.mxu0 0.0
  %869 = vmatpush1.msra.mxu0 0.0
  %870 = vmatprep.subr.mxu0 0.0
  %871 = vmatpush1.msra.mxu0 0.0
  %872 = vmatprep.subr.mxu0 0.0
  %873 = vmatpush1.msra.mxu0 0.0
  %874 = vmatprep.subr.mxu0 0.0
  %875 = vmatpush1.msra.mxu0 0.0
  %876 = vmatprep.subr.mxu0 0.0
  %877 = vmatpush1.msra.mxu0 0.0
  %878 = vmatprep.subr.mxu0 0.0
  %879 = vmatpush1.msra.mxu0 0.0
  %880 = vmatprep.subr.mxu0 0.0
  %881 = vmatpush1.msra.mxu0 0.0
  %882 = vmatprep.subr.mxu0 0.0
  %883 = vmatpush1.msra.mxu0 0.0
  %884 = vmatprep.subr.mxu0 0.0
  %885 = vmatpush1.msra.mxu0 0.0
  %886 = vmatprep.mubr.f32.mxu0 0.0
  %887 = vmatmul.mubr.f32.gmra.mrb[0].mxu0 %v747
  %v888 = vpop.f32.mrb[0].mxu0
  %v889 = vadd.f32 %v417, %v888
  %v890 = vpop.f32.mrb[0].mxu0
  %891 = vdwg.mxu0
  %v892 = vadd.f32 %v748, %v818
  %v893 = vxor.u32 %v892, 2147483648
  %v894 = vmul.f32 %v893, 1.442695
  %v895 = vpow.pop %v894
  %v896 = vadd.f32 %v895, 1.0
  %v897 = vrcp.pop %v896
  %v898 = vmul.f32 1.0, %v897
  %v899 = vadd.f32 %v749, %v820
  %v900 = vxor.u32 %v899, 2147483648
  %v901 = vmul.f32 %v900, 1.442695
  %v902 = vpow.pop %v901
  %v903 = vadd.f32 %v902, 1.0
  %v904 = vrcp.pop %v903
  %v905 = vmul.f32 1.0, %v904
  %v906 = vmul.f32 %v898, %v889
  %v907 = vadd.f32 %v750, %v906
  %v908 = vtanh.pop %v907
  %v909 = vsub.f32 1.0, %v905
  %v910 = vmul.f32 %v909, %v908
  %v911 = vmul.f32 %v905, %v747
  %v912 = vadd.f32 %v910, %v911
  %v913 = vld [vmem:[#allocation3 + $0x48] sm:$0xff]
  %v914 = vld [vmem:[#allocation3 + $0x50] sm:$0xff]
  %v915 = vld [vmem:[#allocation3 + $0x58] sm:$0xff]
  %916 = vmatprep.subr.mxu0 %v357
  %917 = vmatpush1.msra.mxu0 %v356
  %918 = vmatprep.subr.mxu0 %v360
  %919 = vmatpush1.msra.mxu0 %v359
  %920 = vmatprep.subr.mxu0 %v363
  %921 = vmatpush1.msra.mxu0 %v362
  %922 = vmatprep.subr.mxu0 %v366
  %923 = vmatpush1.msra.mxu0 %v365
  %924 = vmatprep.subr.mxu0 %v369
  %925 = vmatpush1.msra.mxu0 %v368
  %926 = vmatprep.subr.mxu0 %v372
  %927 = vmatpush1.msra.mxu0 %v371
  %928 = vmatprep.subr.mxu0 %v375
  %929 = vmatpush1.msra.mxu0 %v374
  %930 = vmatprep.subr.mxu0 %v378
  %931 = vmatpush1.msra.mxu0 %v377
  %932 = vmatprep.subr.mxu0 %v381
  %933 = vmatpush1.msra.mxu0 %v380
  %934 = vmatprep.subr.mxu0 %v384
  %935 = vmatpush1.msra.mxu0 %v383
  %936 = vmatprep.subr.mxu0 %v387
  %937 = vmatpush1.msra.mxu0 %v386
  %938 = vmatprep.subr.mxu0 %v390
  %939 = vmatpush1.msra.mxu0 %v389
  %940 = vmatprep.subr.mxu0 %v393
  %941 = vmatpush1.msra.mxu0 %v392
  %942 = vmatprep.subr.mxu0 %v396
  %943 = vmatpush1.msra.mxu0 %v395
  %944 = vmatprep.subr.mxu0 %v399
  %945 = vmatpush1.msra.mxu0 %v398
  %946 = vmatprep.subr.mxu0 %v402
  %947 = vmatpush1.msra.mxu0 %v401
  %948 = vmatprep.subr.mxu0 0.0
  %949 = vmatpush1.msra.mxu0 0.0
  %950 = vmatprep.subr.mxu0 0.0
  %951 = vmatpush1.msra.mxu0 0.0
  %952 = vmatprep.subr.mxu0 0.0
  %953 = vmatpush1.msra.mxu0 0.0
  %954 = vmatprep.subr.mxu0 0.0
  %955 = vmatpush1.msra.mxu0 0.0
  %956 = vmatprep.subr.mxu0 0.0
  %957 = vmatpush1.msra.mxu0 0.0
  %958 = vmatprep.subr.mxu0 0.0
  %959 = vmatpush1.msra.mxu0 0.0
  %960 = vmatprep.subr.mxu0 0.0
  %961 = vmatpush1.msra.mxu0 0.0
  %962 = vmatprep.subr.mxu0 0.0
  %963 = vmatpush1.msra.mxu0 0.0
  %964 = vmatprep.subr.mxu0 0.0
  %965 = vmatpush1.msra.mxu0 0.0
  %966 = vmatprep.subr.mxu0 0.0
  %967 = vmatpush1.msra.mxu0 0.0
  %968 = vmatprep.subr.mxu0 0.0
  %969 = vmatpush1.msra.mxu0 0.0
  %970 = vmatprep.subr.mxu0 0.0
  %971 = vmatpush1.msra.mxu0 0.0
  %972 = vmatprep.subr.mxu0 0.0
  %973 = vmatpush1.msra.mxu0 0.0
  %974 = vmatprep.subr.mxu0 0.0
  %975 = vmatpush1.msra.mxu0 0.0
  %976 = vmatprep.subr.mxu0 0.0
  %977 = vmatpush1.msra.mxu0 0.0
  %978 = vmatprep.subr.mxu0 0.0
  %979 = vmatpush1.msra.mxu0 0.0
  %980 = vmatprep.mubr.f32.mxu0 0.0
  %981 = vmatmul.mubr.f32.gmra.mrb[0].mxu0 %v912
  %v982 = vpop.f32.mrb[0].mxu0
  %v983 = vadd.f32 %v409, %v982
  %v984 = vpop.f32.mrb[0].mxu0
  %v985 = vadd.f32 %v413, %v984
  %986 = vdwg.mxu0
  %987 = vmatprep.subr.mxu0 0.0
  %988 = vmatpush1.msra.mxu0 %v358
  %989 = vmatprep.subr.mxu0 0.0
  %990 = vmatpush1.msra.mxu0 %v361
  %991 = vmatprep.subr.mxu0 0.0
  %992 = vmatpush1.msra.mxu0 %v364
  %993 = vmatprep.subr.mxu0 0.0
  %994 = vmatpush1.msra.mxu0 %v367
  %995 = vmatprep.subr.mxu0 0.0
  %996 = vmatpush1.msra.mxu0 %v370
  %997 = vmatprep.subr.mxu0 0.0
  %998 = vmatpush1.msra.mxu0 %v373
  %999 = vmatprep.subr.mxu0 0.0
  %1000 = vmatpush1.msra.mxu0 %v376
  %1001 = vmatprep.subr.mxu0 0.0
  %1002 = vmatpush1.msra.mxu0 %v379
  %1003 = vmatprep.subr.mxu0 0.0
  %1004 = vmatpush1.msra.mxu0 %v382
  %1005 = vmatprep.subr.mxu0 0.0
  %1006 = vmatpush1.msra.mxu0 %v385
  %1007 = vmatprep.subr.mxu0 0.0
  %1008 = vmatpush1.msra.mxu0 %v388
  %1009 = vmatprep.subr.mxu0 0.0
  %1010 = vmatpush1.msra.mxu0 %v391
  %1011 = vmatprep.subr.mxu0 0.0
  %1012 = vmatpush1.msra.mxu0 %v394
  %1013 = vmatprep.subr.mxu0 0.0
  %1014 = vmatpush1.msra.mxu0 %v397
  %1015 = vmatprep.subr.mxu0 0.0
  %1016 = vmatpush1.msra.mxu0 %v400
  %1017 = vmatprep.subr.mxu0 0.0
  %1018 = vmatpush1.msra.mxu0 %v403
  %1019 = vmatprep.subr.mxu0 0.0
  %1020 = vmatpush1.msra.mxu0 0.0
  %1021 = vmatprep.subr.mxu0 0.0
  %1022 = vmatpush1.msra.mxu0 0.0
  %1023 = vmatprep.subr.mxu0 0.0
  %1024 = vmatpush1.msra.mxu0 0.0
  %1025 = vmatprep.subr.mxu0 0.0
  %1026 = vmatpush1.msra.mxu0 0.0
  %1027 = vmatprep.subr.mxu0 0.0
  %1028 = vmatpush1.msra.mxu0 0.0
  %1029 = vmatprep.subr.mxu0 0.0
  %1030 = vmatpush1.msra.mxu0 0.0
  %1031 = vmatprep.subr.mxu0 0.0
  %1032 = vmatpush1.msra.mxu0 0.0
  %1033 = vmatprep.subr.mxu0 0.0
  %1034 = vmatpush1.msra.mxu0 0.0
  %1035 = vmatprep.subr.mxu0 0.0
  %1036 = vmatpush1.msra.mxu0 0.0
  %1037 = vmatprep.subr.mxu0 0.0
  %1038 = vmatpush1.msra.mxu0 0.0
  %1039 = vmatprep.subr.mxu0 0.0
  %1040 = vmatpush1.msra.mxu0 0.0
  %1041 = vmatprep.subr.mxu0 0.0
  %1042 = vmatpush1.msra.mxu0 0.0
  %1043 = vmatprep.subr.mxu0 0.0
  %1044 = vmatpush1.msra.mxu0 0.0
  %1045 = vmatprep.subr.mxu0 0.0
  %1046 = vmatpush1.msra.mxu0 0.0
  %1047 = vmatprep.subr.mxu0 0.0
  %1048 = vmatpush1.msra.mxu0 0.0
  %1049 = vmatprep.subr.mxu0 0.0
  %1050 = vmatpush1.msra.mxu0 0.0
  %1051 = vmatprep.mubr.f32.mxu0 0.0
  %1052 = vmatmul.mubr.f32.gmra.mrb[0].mxu0 %v912
  %v1053 = vpop.f32.mrb[0].mxu0
  %v1054 = vadd.f32 %v417, %v1053
  %v1055 = vpop.f32.mrb[0].mxu0
  %1056 = vdwg.mxu0
  %v1057 = vadd.f32 %v913, %v983
  %v1058 = vxor.u32 %v1057, 2147483648
  %v1059 = vmul.f32 %v1058, 1.442695
  %v1060 = vpow.pop %v1059
  %v1061 = vadd.f32 %v1060, 1.0
  %v1062 = vrcp.pop %v1061
  %v1063 = vmul.f32 1.0, %v1062
  %v1064 = vadd.f32 %v914, %v985
  %v1065 = vxor.u32 %v1064, 2147483648
  %v1066 = vmul.f32 %v1065, 1.442695
  %v1067 = vpow.pop %v1066
  %v1068 = vadd.f32 %v1067, 1.0
  %v1069 = vrcp.pop %v1068
  %v1070 = vmul.f32 1.0, %v1069
  %v1071 = vmul.f32 %v1063, %v1054
  %v1072 = vadd.f32 %v915, %v1071
  %v1073 = vtanh.pop %v1072
  %v1074 = vsub.f32 1.0, %v1070
  %v1075 = vmul.f32 %v1074, %v1073
  %v1076 = vmul.f32 %v1070, %v912
  %v1077 = vadd.f32 %v1075, %v1076
  %v1078 = vld [vmem:[#allocation3 + $0x60] sm:$0xff]
  %v1079 = vld [vmem:[#allocation3 + $0x68] sm:$0xff]
  %v1080 = vld [vmem:[#allocation3 + $0x70] sm:$0xff]
  %1081 = vmatprep.subr.mxu0 %v357
  %1082 = vmatpush1.msra.mxu0 %v356
  %1083 = vmatprep.subr.mxu0 %v360
  %1084 = vmatpush1.msra.mxu0 %v359
  %1085 = vmatprep.subr.mxu0 %v363
  %1086 = vmatpush1.msra.mxu0 %v362
  %1087 = vmatprep.subr.mxu0 %v366
  %1088 = vmatpush1.msra.mxu0 %v365
  %1089 = vmatprep.subr.mxu0 %v369
  %1090 = vmatpush1.msra.mxu0 %v368
  %1091 = vmatprep.subr.mxu0 %v372
  %1092 = vmatpush1.msra.mxu0 %v371
  %1093 = vmatprep.subr.mxu0 %v375
  %1094 = vmatpush1.msra.mxu0 %v374
  %1095 = vmatprep.subr.mxu0 %v378
  %1096 = vmatpush1.msra.mxu0 %v377
  %1097 = vmatprep.subr.mxu0 %v381
  %1098 = vmatpush1.msra.mxu0 %v380
  %1099 = vmatprep.subr.mxu0 %v384
  %1100 = vmatpush1.msra.mxu0 %v383
  %1101 = vmatprep.subr.mxu0 %v387
  %1102 = vmatpush1.msra.mxu0 %v386
  %1103 = vmatprep.subr.mxu0 %v390
  %1104 = vmatpush1.msra.mxu0 %v389
  %1105 = vmatprep.subr.mxu0 %v393
  %1106 = vmatpush1.msra.mxu0 %v392
  %1107 = vmatprep.subr.mxu0 %v396
  %1108 = vmatpush1.msra.mxu0 %v395
  %1109 = vmatprep.subr.mxu0 %v399
  %1110 = vmatpush1.msra.mxu0 %v398
  %1111 = vmatprep.subr.mxu0 %v402
  %1112 = vmatpush1.msra.mxu0 %v401
  %1113 = vmatprep.subr.mxu0 0.0
  %1114 = vmatpush1.msra.mxu0 0.0
  %1115 = vmatprep.subr.mxu0 0.0
  %1116 = vmatpush1.msra.mxu0 0.0
  %1117 = vmatprep.subr.mxu0 0.0
  %1118 = vmatpush1.msra.mxu0 0.0
  %1119 = vmatprep.subr.mxu0 0.0
  %1120 = vmatpush1.msra.mxu0 0.0
  %1121 = vmatprep.subr.mxu0 0.0
  %1122 = vmatpush1.msra.mxu0 0.0
  %1123 = vmatprep.subr.mxu0 0.0
  %1124 = vmatpush1.msra.mxu0 0.0
  %1125 = vmatprep.subr.mxu0 0.0
  %1126 = vmatpush1.msra.mxu0 0.0
  %1127 = vmatprep.subr.mxu0 0.0
  %1128 = vmatpush1.msra.mxu0 0.0
  %1129 = vmatprep.subr.mxu0 0.0
  %1130 = vmatpush1.msra.mxu0 0.0
  %1131 = vmatprep.subr.mxu0 0.0
  %1132 = vmatpush1.msra.mxu0 0.0
  %1133 = vmatprep.subr.mxu0 0.0
  %1134 = vmatpush1.msra.mxu0 0.0
  %1135 = vmatprep.subr.mxu0 0.0
  %1136 = vmatpush1.msra.mxu0 0.0
  %1137 = vmatprep.subr.mxu0 0.0
  %1138 = vmatpush1.msra.mxu0 0.0
  %1139 = vmatprep.subr.mxu0 0.0
  %1140 = vmatpush1.msra.mxu0 0.0
  %1141 = vmatprep.subr.mxu0 0.0
  %1142 = vmatpush1.msra.mxu0 0.0
  %1143 = vmatprep.subr.mxu0 0.0
  %1144 = vmatpush1.msra.mxu0 0.0
  %1145 = vmatprep.mubr.f32.mxu0 0.0
  %1146 = vmatmul.mubr.f32.gmra.mrb[0].mxu0 %v1077
  %v1147 = vpop.f32.mrb[0].mxu0
  %v1148 = vadd.f32 %v409, %v1147
  %v1149 = vpop.f32.mrb[0].mxu0
  %v1150 = vadd.f32 %v413, %v1149
  %1151 = vdwg.mxu0
  %1152 = vmatprep.subr.mxu0 0.0
  %1153 = vmatpush1.msra.mxu0 %v358
  %1154 = vmatprep.subr.mxu0 0.0
  %1155 = vmatpush1.msra.mxu0 %v361
  %1156 = vmatprep.subr.mxu0 0.0
  %1157 = vmatpush1.msra.mxu0 %v364
  %1158 = vmatprep.subr.mxu0 0.0
  %1159 = vmatpush1.msra.mxu0 %v367
  %1160 = vmatprep.subr.mxu0 0.0
  %1161 = vmatpush1.msra.mxu0 %v370
  %1162 = vmatprep.subr.mxu0 0.0
  %1163 = vmatpush1.msra.mxu0 %v373
  %1164 = vmatprep.subr.mxu0 0.0
  %1165 = vmatpush1.msra.mxu0 %v376
  %1166 = vmatprep.subr.mxu0 0.0
  %1167 = vmatpush1.msra.mxu0 %v379
  %1168 = vmatprep.subr.mxu0 0.0
  %1169 = vmatpush1.msra.mxu0 %v382
  %1170 = vmatprep.subr.mxu0 0.0
  %1171 = vmatpush1.msra.mxu0 %v385
  %1172 = vmatprep.subr.mxu0 0.0
  %1173 = vmatpush1.msra.mxu0 %v388
  %1174 = vmatprep.subr.mxu0 0.0
  %1175 = vmatpush1.msra.mxu0 %v391
  %1176 = vmatprep.subr.mxu0 0.0
  %1177 = vmatpush1.msra.mxu0 %v394
  %1178 = vmatprep.subr.mxu0 0.0
  %1179 = vmatpush1.msra.mxu0 %v397
  %1180 = vmatprep.subr.mxu0 0.0
  %1181 = vmatpush1.msra.mxu0 %v400
  %1182 = vmatprep.subr.mxu0 0.0
  %1183 = vmatpush1.msra.mxu0 %v403
  %1184 = vmatprep.subr.mxu0 0.0
  %1185 = vmatpush1.msra.mxu0 0.0
  %1186 = vmatprep.subr.mxu0 0.0
  %1187 = vmatpush1.msra.mxu0 0.0
  %1188 = vmatprep.subr.mxu0 0.0
  %1189 = vmatpush1.msra.mxu0 0.0
  %1190 = vmatprep.subr.mxu0 0.0
  %1191 = vmatpush1.msra.mxu0 0.0
  %1192 = vmatprep.subr.mxu0 0.0
  %1193 = vmatpush1.msra.mxu0 0.0
  %1194 = vmatprep.subr.mxu0 0.0
  %1195 = vmatpush1.msra.mxu0 0.0
  %1196 = vmatprep.subr.mxu0 0.0
  %1197 = vmatpush1.msra.mxu0 0.0
  %1198 = vmatprep.subr.mxu0 0.0
  %1199 = vmatpush1.msra.mxu0 0.0
  %1200 = vmatprep.subr.mxu0 0.0
  %1201 = vmatpush1.msra.mxu0 0.0
  %1202 = vmatprep.subr.mxu0 0.0
  %1203 = vmatpush1.msra.mxu0 0.0
  %1204 = vmatprep.subr.mxu0 0.0
  %1205 = vmatpush1.msra.mxu0 0.0
  %1206 = vmatprep.subr.mxu0 0.0
  %1207 = vmatpush1.msra.mxu0 0.0
  %1208 = vmatprep.subr.mxu0 0.0
  %1209 = vmatpush1.msra.mxu0 0.0
  %1210 = vmatprep.subr.mxu0 0.0
  %1211 = vmatpush1.msra.mxu0 0.0
  %1212 = vmatprep.subr.mxu0 0.0
  %1213 = vmatpush1.msra.mxu0 0.0
  %1214 = vmatprep.subr.mxu0 0.0
  %1215 = vmatpush1.msra.mxu0 0.0
  %1216 = vmatprep.mubr.f32.mxu0 0.0
  %1217 = vmatmul.mubr.f32.gmra.mrb[0].mxu0 %v1077
  %v1218 = vpop.f32.mrb[0].mxu0
  %v1219 = vadd.f32 %v417, %v1218
  %v1220 = vpop.f32.mrb[0].mxu0
  %1221 = vdwg.mxu0
  %v1222 = vadd.f32 %v1078, %v1148
  %v1223 = vxor.u32 %v1222, 2147483648
  %v1224 = vmul.f32 %v1223, 1.442695
  %v1225 = vpow.pop %v1224
  %v1226 = vadd.f32 %v1225, 1.0
  %v1227 = vrcp.pop %v1226
  %v1228 = vmul.f32 1.0, %v1227
  %v1229 = vadd.f32 %v1079, %v1150
  %v1230 = vxor.u32 %v1229, 2147483648
  %v1231 = vmul.f32 %v1230, 1.442695
  %v1232 = vpow.pop %v1231
  %v1233 = vadd.f32 %v1232, 1.0
  %v1234 = vrcp.pop %v1233
  %v1235 = vmul.f32 1.0, %v1234
  %v1236 = vmul.f32 %v1228, %v1219
  %v1237 = vadd.f32 %v1080, %v1236
  %v1238 = vtanh.pop %v1237
  %v1239 = vsub.f32 1.0, %v1235
  %v1240 = vmul.f32 %v1239, %v1238
  %v1241 = vmul.f32 %v1235, %v1077
  %v1242 = vadd.f32 %v1240, %v1241
  %v1243 = vld [vmem:[#allocation3 + $0x78] sm:$0xff]
  %v1244 = vld [vmem:[#allocation3 + $0x80] sm:$0xff]
  %v1245 = vld [vmem:[#allocation3 + $0x88] sm:$0xff]
  %1246 = vmatprep.subr.mxu0 %v357
  %1247 = vmatpush1.msra.mxu0 %v356
  %1248 = vmatprep.subr.mxu0 %v360
  %1249 = vmatpush1.msra.mxu0 %v359
  %1250 = vmatprep.subr.mxu0 %v363
  %1251 = vmatpush1.msra.mxu0 %v362
  %1252 = vmatprep.subr.mxu0 %v366
  %1253 = vmatpush1.msra.mxu0 %v365
  %1254 = vmatprep.subr.mxu0 %v369
  %1255 = vmatpush1.msra.mxu0 %v368
  %1256 = vmatprep.subr.mxu0 %v372
  %1257 = vmatpush1.msra.mxu0 %v371
  %1258 = vmatprep.subr.mxu0 %v375
  %1259 = vmatpush1.msra.mxu0 %v374
  %1260 = vmatprep.subr.mxu0 %v378
  %1261 = vmatpush1.msra.mxu0 %v377
  %1262 = vmatprep.subr.mxu0 %v381
  %1263 = vmatpush1.msra.mxu0 %v380
  %1264 = vmatprep.subr.mxu0 %v384
  %1265 = vmatpush1.msra.mxu0 %v383
  %1266 = vmatprep.subr.mxu0 %v387
  %1267 = vmatpush1.msra.mxu0 %v386
  %1268 = vmatprep.subr.mxu0 %v390
  %1269 = vmatpush1.msra.mxu0 %v389
  %1270 = vmatprep.subr.mxu0 %v393
  %1271 = vmatpush1.msra.mxu0 %v392
  %1272 = vmatprep.subr.mxu0 %v396
  %1273 = vmatpush1.msra.mxu0 %v395
  %1274 = vmatprep.subr.mxu0 %v399
  %1275 = vmatpush1.msra.mxu0 %v398
  %1276 = vmatprep.subr.mxu0 %v402
  %1277 = vmatpush1.msra.mxu0 %v401
  %1278 = vmatprep.subr.mxu0 0.0
  %1279 = vmatpush1.msra.mxu0 0.0
  %1280 = vmatprep.subr.mxu0 0.0
  %1281 = vmatpush1.msra.mxu0 0.0
  %1282 = vmatprep.subr.mxu0 0.0
  %1283 = vmatpush1.msra.mxu0 0.0
  %1284 = vmatprep.subr.mxu0 0.0
  %1285 = vmatpush1.msra.mxu0 0.0
  %1286 = vmatprep.subr.mxu0 0.0
  %1287 = vmatpush1.msra.mxu0 0.0
  %1288 = vmatprep.subr.mxu0 0.0
  %1289 = vmatpush1.msra.mxu0 0.0
  %1290 = vmatprep.subr.mxu0 0.0
  %1291 = vmatpush1.msra.mxu0 0.0
  %1292 = vmatprep.subr.mxu0 0.0
  %1293 = vmatpush1.msra.mxu0 0.0
  %1294 = vmatprep.subr.mxu0 0.0
  %1295 = vmatpush1.msra.mxu0 0.0
  %1296 = vmatprep.subr.mxu0 0.0
  %1297 = vmatpush1.msra.mxu0 0.0
  %1298 = vmatprep.subr.mxu0 0.0
  %1299 = vmatpush1.msra.mxu0 0.0
  %1300 = vmatprep.subr.mxu0 0.0
  %1301 = vmatpush1.msra.mxu0 0.0
  %1302 = vmatprep.subr.mxu0 0.0
  %1303 = vmatpush1.msra.mxu0 0.0
  %1304 = vmatprep.subr.mxu0 0.0
  %1305 = vmatpush1.msra.mxu0 0.0
  %1306 = vmatprep.subr.mxu0 0.0
  %1307 = vmatpush1.msra.mxu0 0.0
  %1308 = vmatprep.subr.mxu0 0.0
  %1309 = vmatpush1.msra.mxu0 0.0
  %1310 = vmatprep.mubr.f32.mxu0 0.0
  %1311 = vmatmul.mubr.f32.gmra.mrb[0].mxu0 %v1242
  %v1312 = vpop.f32.mrb[0].mxu0
  %v1313 = vadd.f32 %v409, %v1312
  %v1314 = vpop.f32.mrb[0].mxu0
  %v1315 = vadd.f32 %v413, %v1314
  %1316 = vdwg.mxu0
  %1317 = vmatprep.subr.mxu0 0.0
  %1318 = vmatpush1.msra.mxu0 %v358
  %1319 = vmatprep.subr.mxu0 0.0
  %1320 = vmatpush1.msra.mxu0 %v361
  %1321 = vmatprep.subr.mxu0 0.0
  %1322 = vmatpush1.msra.mxu0 %v364
  %1323 = vmatprep.subr.mxu0 0.0
  %1324 = vmatpush1.msra.mxu0 %v367
  %1325 = vmatprep.subr.mxu0 0.0
  %1326 = vmatpush1.msra.mxu0 %v370
  %1327 = vmatprep.subr.mxu0 0.0
  %1328 = vmatpush1.msra.mxu0 %v373
  %1329 = vmatprep.subr.mxu0 0.0
  %1330 = vmatpush1.msra.mxu0 %v376
  %1331 = vmatprep.subr.mxu0 0.0
  %1332 = vmatpush1.msra.mxu0 %v379
  %1333 = vmatprep.subr.mxu0 0.0
  %1334 = vmatpush1.msra.mxu0 %v382
  %1335 = vmatprep.subr.mxu0 0.0
  %1336 = vmatpush1.msra.mxu0 %v385
  %1337 = vmatprep.subr.mxu0 0.0
  %1338 = vmatpush1.msra.mxu0 %v388
  %1339 = vmatprep.subr.mxu0 0.0
  %1340 = vmatpush1.msra.mxu0 %v391
  %1341 = vmatprep.subr.mxu0 0.0
  %1342 = vmatpush1.msra.mxu0 %v394
  %1343 = vmatprep.subr.mxu0 0.0
  %1344 = vmatpush1.msra.mxu0 %v397
  %1345 = vmatprep.subr.mxu0 0.0
  %1346 = vmatpush1.msra.mxu0 %v400
  %1347 = vmatprep.subr.mxu0 0.0
  %1348 = vmatpush1.msra.mxu0 %v403
  %1349 = vmatprep.subr.mxu0 0.0
  %1350 = vmatpush1.msra.mxu0 0.0
  %1351 = vmatprep.subr.mxu0 0.0
  %1352 = vmatpush1.msra.mxu0 0.0
  %1353 = vmatprep.subr.mxu0 0.0
  %1354 = vmatpush1.msra.mxu0 0.0
  %1355 = vmatprep.subr.mxu0 0.0
  %1356 = vmatpush1.msra.mxu0 0.0
  %1357 = vmatprep.subr.mxu0 0.0
  %1358 = vmatpush1.msra.mxu0 0.0
  %1359 = vmatprep.subr.mxu0 0.0
  %1360 = vmatpush1.msra.mxu0 0.0
  %1361 = vmatprep.subr.mxu0 0.0
  %1362 = vmatpush1.msra.mxu0 0.0
  %1363 = vmatprep.subr.mxu0 0.0
  %1364 = vmatpush1.msra.mxu0 0.0
  %1365 = vmatprep.subr.mxu0 0.0
  %1366 = vmatpush1.msra.mxu0 0.0
  %1367 = vmatprep.subr.mxu0 0.0
  %1368 = vmatpush1.msra.mxu0 0.0
  %1369 = vmatprep.subr.mxu0 0.0
  %1370 = vmatpush1.msra.mxu0 0.0
  %1371 = vmatprep.subr.mxu0 0.0
  %1372 = vmatpush1.msra.mxu0 0.0
  %1373 = vmatprep.subr.mxu0 0.0
  %1374 = vmatpush1.msra.mxu0 0.0
  %1375 = vmatprep.subr.mxu0 0.0
  %1376 = vmatpush1.msra.mxu0 0.0
  %1377 = vmatprep.subr.mxu0 0.0
  %1378 = vmatpush1.msra.mxu0 0.0
  %1379 = vmatprep.subr.mxu0 0.0
  %1380 = vmatpush1.msra.mxu0 0.0
  %1381 = vmatprep.mubr.f32.mxu0 0.0
  %1382 = vmatmul.mubr.f32.gmra.mrb[0].mxu0 %v1242
  %v1383 = vpop.f32.mrb[0].mxu0
  %v1384 = vadd.f32 %v417, %v1383
  %v1385 = vpop.f32.mrb[0].mxu0
  %1386 = vdwg.mxu0
  %v1387 = vadd.f32 %v1243, %v1313
  %v1388 = vxor.u32 %v1387, 2147483648
  %v1389 = vmul.f32 %v1388, 1.442695
  %v1390 = vpow.pop %v1389
  %v1391 = vadd.f32 %v1390, 1.0
  %v1392 = vrcp.pop %v1391
  %v1393 = vmul.f32 1.0, %v1392
  %v1394 = vadd.f32 %v1244, %v1315
  %v1395 = vxor.u32 %v1394, 2147483648
  %v1396 = vmul.f32 %v1395, 1.442695
  %v1397 = vpow.pop %v1396
  %v1398 = vadd.f32 %v1397, 1.0
  %v1399 = vrcp.pop %v1398
  %v1400 = vmul.f32 1.0, %v1399
  %v1401 = vmul.f32 %v1393, %v1384
  %v1402 = vadd.f32 %v1245, %v1401
  %v1403 = vtanh.pop %v1402
  %v1404 = vsub.f32 1.0, %v1400
  %v1405 = vmul.f32 %v1404, %v1403
  %v1406 = vmul.f32 %v1400, %v1242
  %v1407 = vadd.f32 %v1405, %v1406
  %v1408 = vld [vmem:[#allocation3 + $0x90] sm:$0xff]
  %v1409 = vld [vmem:[#allocation3 + $0x98] sm:$0xff]
  %v1410 = vld [vmem:[#allocation3 + $0xa0] sm:$0xff]
  %1411 = vmatprep.subr.mxu0 %v357
  %1412 = vmatpush1.msra.mxu0 %v356
  %1413 = vmatprep.subr.mxu0 %v360
  %1414 = vmatpush1.msra.mxu0 %v359
  %1415 = vmatprep.subr.mxu0 %v363
  %1416 = vmatpush1.msra.mxu0 %v362
  %1417 = vmatprep.subr.mxu0 %v366
  %1418 = vmatpush1.msra.mxu0 %v365
  %1419 = vmatprep.subr.mxu0 %v369
  %1420 = vmatpush1.msra.mxu0 %v368
  %1421 = vmatprep.subr.mxu0 %v372
  %1422 = vmatpush1.msra.mxu0 %v371
  %1423 = vmatprep.subr.mxu0 %v375
  %1424 = vmatpush1.msra.mxu0 %v374
  %1425 = vmatprep.subr.mxu0 %v378
  %1426 = vmatpush1.msra.mxu0 %v377
  %1427 = vmatprep.subr.mxu0 %v381
  %1428 = vmatpush1.msra.mxu0 %v380
  %1429 = vmatprep.subr.mxu0 %v384
  %1430 = vmatpush1.msra.mxu0 %v383
  %1431 = vmatprep.subr.mxu0 %v387
  %1432 = vmatpush1.msra.mxu0 %v386
  %1433 = vmatprep.subr.mxu0 %v390
  %1434 = vmatpush1.msra.mxu0 %v389
  %1435 = vmatprep.subr.mxu0 %v393
  %1436 = vmatpush1.msra.mxu0 %v392
  %1437 = vmatprep.subr.mxu0 %v396
  %1438 = vmatpush1.msra.mxu0 %v395
  %1439 = vmatprep.subr.mxu0 %v399
  %1440 = vmatpush1.msra.mxu0 %v398
  %1441 = vmatprep.subr.mxu0 %v402
  %1442 = vmatpush1.msra.mxu0 %v401
  %1443 = vmatprep.subr.mxu0 0.0
  %1444 = vmatpush1.msra.mxu0 0.0
  %1445 = vmatprep.subr.mxu0 0.0
  %1446 = vmatpush1.msra.mxu0 0.0
  %1447 = vmatprep.subr.mxu0 0.0
  %1448 = vmatpush1.msra.mxu0 0.0
  %1449 = vmatprep.subr.mxu0 0.0
  %1450 = vmatpush1.msra.mxu0 0.0
  %1451 = vmatprep.subr.mxu0 0.0
  %1452 = vmatpush1.msra.mxu0 0.0
  %1453 = vmatprep.subr.mxu0 0.0
  %1454 = vmatpush1.msra.mxu0 0.0
  %1455 = vmatprep.subr.mxu0 0.0
  %1456 = vmatpush1.msra.mxu0 0.0
  %1457 = vmatprep.subr.mxu0 0.0
  %1458 = vmatpush1.msra.mxu0 0.0
  %1459 = vmatprep.subr.mxu0 0.0
  %1460 = vmatpush1.msra.mxu0 0.0
  %1461 = vmatprep.subr.mxu0 0.0
  %1462 = vmatpush1.msra.mxu0 0.0
  %1463 = vmatprep.subr.mxu0 0.0
  %1464 = vmatpush1.msra.mxu0 0.0
  %1465 = vmatprep.subr.mxu0 0.0
  %1466 = vmatpush1.msra.mxu0 0.0
  %1467 = vmatprep.subr.mxu0 0.0
  %1468 = vmatpush1.msra.mxu0 0.0
  %1469 = vmatprep.subr.mxu0 0.0
  %1470 = vmatpush1.msra.mxu0 0.0
  %1471 = vmatprep.subr.mxu0 0.0
  %1472 = vmatpush1.msra.mxu0 0.0
  %1473 = vmatprep.subr.mxu0 0.0
  %1474 = vmatpush1.msra.mxu0 0.0
  %1475 = vmatprep.mubr.f32.mxu0 0.0
  %1476 = vmatmul.mubr.f32.gmra.mrb[0].mxu0 %v1407
  %v1477 = vpop.f32.mrb[0].mxu0
  %v1478 = vadd.f32 %v409, %v1477
  %v1479 = vpop.f32.mrb[0].mxu0
  %v1480 = vadd.f32 %v413, %v1479
  %1481 = vdwg.mxu0
  %1482 = vmatprep.subr.mxu0 0.0
  %1483 = vmatpush1.msra.mxu0 %v358
  %1484 = vmatprep.subr.mxu0 0.0
  %1485 = vmatpush1.msra.mxu0 %v361
  %1486 = vmatprep.subr.mxu0 0.0
  %1487 = vmatpush1.msra.mxu0 %v364
  %1488 = vmatprep.subr.mxu0 0.0
  %1489 = vmatpush1.msra.mxu0 %v367
  %1490 = vmatprep.subr.mxu0 0.0
  %1491 = vmatpush1.msra.mxu0 %v370
  %1492 = vmatprep.subr.mxu0 0.0
  %1493 = vmatpush1.msra.mxu0 %v373
  %1494 = vmatprep.subr.mxu0 0.0
  %1495 = vmatpush1.msra.mxu0 %v376
  %1496 = vmatprep.subr.mxu0 0.0
  %1497 = vmatpush1.msra.mxu0 %v379
  %1498 = vmatprep.subr.mxu0 0.0
  %1499 = vmatpush1.msra.mxu0 %v382
  %1500 = vmatprep.subr.mxu0 0.0
  %1501 = vmatpush1.msra.mxu0 %v385
  %1502 = vmatprep.subr.mxu0 0.0
  %1503 = vmatpush1.msra.mxu0 %v388
  %1504 = vmatprep.subr.mxu0 0.0
  %1505 = vmatpush1.msra.mxu0 %v391
  %1506 = vmatprep.subr.mxu0 0.0
  %1507 = vmatpush1.msra.mxu0 %v394
  %1508 = vmatprep.subr.mxu0 0.0
  %1509 = vmatpush1.msra.mxu0 %v397
  %1510 = vmatprep.subr.mxu0 0.0
  %1511 = vmatpush1.msra.mxu0 %v400
  %1512 = vmatprep.subr.mxu0 0.0
  %1513 = vmatpush1.msra.mxu0 %v403
  %1514 = vmatprep.subr.mxu0 0.0
  %1515 = vmatpush1.msra.mxu0 0.0
  %1516 = vmatprep.subr.mxu0 0.0
  %1517 = vmatpush1.msra.mxu0 0.0
  %1518 = vmatprep.subr.mxu0 0.0
  %1519 = vmatpush1.msra.mxu0 0.0
  %1520 = vmatprep.subr.mxu0 0.0
  %1521 = vmatpush1.msra.mxu0 0.0
  %1522 = vmatprep.subr.mxu0 0.0
  %1523 = vmatpush1.msra.mxu0 0.0
  %1524 = vmatprep.subr.mxu0 0.0
  %1525 = vmatpush1.msra.mxu0 0.0
  %1526 = vmatprep.subr.mxu0 0.0
  %1527 = vmatpush1.msra.mxu0 0.0
  %1528 = vmatprep.subr.mxu0 0.0
  %1529 = vmatpush1.msra.mxu0 0.0
  %1530 = vmatprep.subr.mxu0 0.0
  %1531 = vmatpush1.msra.mxu0 0.0
  %1532 = vmatprep.subr.mxu0 0.0
  %1533 = vmatpush1.msra.mxu0 0.0
  %1534 = vmatprep.subr.mxu0 0.0
  %1535 = vmatpush1.msra.mxu0 0.0
  %1536 = vmatprep.subr.mxu0 0.0
  %1537 = vmatpush1.msra.mxu0 0.0
  %1538 = vmatprep.subr.mxu0 0.0
  %1539 = vmatpush1.msra.mxu0 0.0
  %1540 = vmatprep.subr.mxu0 0.0
  %1541 = vmatpush1.msra.mxu0 0.0
  %1542 = vmatprep.subr.mxu0 0.0
  %1543 = vmatpush1.msra.mxu0 0.0
  %1544 = vmatprep.subr.mxu0 0.0
  %1545 = vmatpush1.msra.mxu0 0.0
  %1546 = vmatprep.mubr.f32.mxu0 0.0
  %1547 = vmatmul.mubr.f32.gmra.mrb[0].mxu0 %v1407
  %v1548 = vpop.f32.mrb[0].mxu0
  %v1549 = vadd.f32 %v417, %v1548
  %v1550 = vpop.f32.mrb[0].mxu0
  %1551 = vdwg.mxu0
  %v1552 = vadd.f32 %v1408, %v1478
  %v1553 = vxor.u32 %v1552, 2147483648
  %v1554 = vmul.f32 %v1553, 1.442695
  %v1555 = vpow.pop %v1554
  %v1556 = vadd.f32 %v1555, 1.0
  %v1557 = vrcp.pop %v1556
  %v1558 = vmul.f32 1.0, %v1557
  %v1559 = vadd.f32 %v1409, %v1480
  %v1560 = vxor.u32 %v1559, 2147483648
  %v1561 = vmul.f32 %v1560, 1.442695
  %v1562 = vpow.pop %v1561
  %v1563 = vadd.f32 %v1562, 1.0
  %v1564 = vrcp.pop %v1563
  %v1565 = vmul.f32 1.0, %v1564
  %v1566 = vmul.f32 %v1558, %v1549
  %v1567 = vadd.f32 %v1410, %v1566
  %v1568 = vtanh.pop %v1567
  %v1569 = vsub.f32 1.0, %v1565
  %v1570 = vmul.f32 %v1569, %v1568
  %v1571 = vmul.f32 %v1565, %v1407
  %v1572 = vadd.f32 %v1570, %v1571
  %v1573 = vld [vmem:[#allocation3 + $0xa8] sm:$0xff]
  %v1574 = vld [vmem:[#allocation3 + $0xb0] sm:$0xff]
  %v1575 = vld [vmem:[#allocation3 + $0xb8] sm:$0xff]
  %1576 = vmatprep.subr.mxu0 %v357
  %1577 = vmatpush1.msra.mxu0 %v356
  %1578 = vmatprep.subr.mxu0 %v360
  %1579 = vmatpush1.msra.mxu0 %v359
  %1580 = vmatprep.subr.mxu0 %v363
  %1581 = vmatpush1.msra.mxu0 %v362
  %1582 = vmatprep.subr.mxu0 %v366
  %1583 = vmatpush1.msra.mxu0 %v365
  %1584 = vmatprep.subr.mxu0 %v369
  %1585 = vmatpush1.msra.mxu0 %v368
  %1586 = vmatprep.subr.mxu0 %v372
  %1587 = vmatpush1.msra.mxu0 %v371
  %1588 = vmatprep.subr.mxu0 %v375
  %1589 = vmatpush1.msra.mxu0 %v374
  %1590 = vmatprep.subr.mxu0 %v378
  %1591 = vmatpush1.msra.mxu0 %v377
  %1592 = vmatprep.subr.mxu0 %v381
  %1593 = vmatpush1.msra.mxu0 %v380
  %1594 = vmatprep.subr.mxu0 %v384
  %1595 = vmatpush1.msra.mxu0 %v383
  %1596 = vmatprep.subr.mxu0 %v387
  %1597 = vmatpush1.msra.mxu0 %v386
  %1598 = vmatprep.subr.mxu0 %v390
  %1599 = vmatpush1.msra.mxu0 %v389
  %1600 = vmatprep.subr.mxu0 %v393
  %1601 = vmatpush1.msra.mxu0 %v392
  %1602 = vmatprep.subr.mxu0 %v396
  %1603 = vmatpush1.msra.mxu0 %v395
  %1604 = vmatprep.subr.mxu0 %v399
  %1605 = vmatpush1.msra.mxu0 %v398
  %1606 = vmatprep.subr.mxu0 %v402
  %1607 = vmatpush1.msra.mxu0 %v401
  %1608 = vmatprep.subr.mxu0 0.0
  %1609 = vmatpush1.msra.mxu0 0.0
  %1610 = vmatprep.subr.mxu0 0.0
  %1611 = vmatpush1.msra.mxu0 0.0
  %1612 = vmatprep.subr.mxu0 0.0
  %1613 = vmatpush1.msra.mxu0 0.0
  %1614 = vmatprep.subr.mxu0 0.0
  %1615 = vmatpush1.msra.mxu0 0.0
  %1616 = vmatprep.subr.mxu0 0.0
  %1617 = vmatpush1.msra.mxu0 0.0
  %1618 = vmatprep.subr.mxu0 0.0
  %1619 = vmatpush1.msra.mxu0 0.0
  %1620 = vmatprep.subr.mxu0 0.0
  %1621 = vmatpush1.msra.mxu0 0.0
  %1622 = vmatprep.subr.mxu0 0.0
  %1623 = vmatpush1.msra.mxu0 0.0
  %1624 = vmatprep.subr.mxu0 0.0
  %1625 = vmatpush1.msra.mxu0 0.0
  %1626 = vmatprep.subr.mxu0 0.0
  %1627 = vmatpush1.msra.mxu0 0.0
  %1628 = vmatprep.subr.mxu0 0.0
  %1629 = vmatpush1.msra.mxu0 0.0
  %1630 = vmatprep.subr.mxu0 0.0
  %1631 = vmatpush1.msra.mxu0 0.0
  %1632 = vmatprep.subr.mxu0 0.0
  %1633 = vmatpush1.msra.mxu0 0.0
  %1634 = vmatprep.subr.mxu0 0.0
  %1635 = vmatpush1.msra.mxu0 0.0
  %1636 = vmatprep.subr.mxu0 0.0
  %1637 = vmatpush1.msra.mxu0 0.0
  %1638 = vmatprep.subr.mxu0 0.0
  %1639 = vmatpush1.msra.mxu0 0.0
  %1640 = vmatprep.mubr.f32.mxu0 0.0
  %1641 = vmatmul.mubr.f32.gmra.mrb[0].mxu0 %v1572
  %v1642 = vpop.f32.mrb[0].mxu0
  %v1643 = vadd.f32 %v409, %v1642
  %v1644 = vpop.f32.mrb[0].mxu0
  %v1645 = vadd.f32 %v413, %v1644
  %1646 = vdwg.mxu0
  %1647 = vmatprep.subr.mxu0 0.0
  %1648 = vmatpush1.msra.mxu0 %v358
  %1649 = vmatprep.subr.mxu0 0.0
  %1650 = vmatpush1.msra.mxu0 %v361
  %1651 = vmatprep.subr.mxu0 0.0
  %1652 = vmatpush1.msra.mxu0 %v364
  %1653 = vmatprep.subr.mxu0 0.0
  %1654 = vmatpush1.msra.mxu0 %v367
  %1655 = vmatprep.subr.mxu0 0.0
  %1656 = vmatpush1.msra.mxu0 %v370
  %1657 = vmatprep.subr.mxu0 0.0
  %1658 = vmatpush1.msra.mxu0 %v373
  %1659 = vmatprep.subr.mxu0 0.0
  %1660 = vmatpush1.msra.mxu0 %v376
  %1661 = vmatprep.subr.mxu0 0.0
  %1662 = vmatpush1.msra.mxu0 %v379
  %1663 = vmatprep.subr.mxu0 0.0
  %1664 = vmatpush1.msra.mxu0 %v382
  %1665 = vmatprep.subr.mxu0 0.0
  %1666 = vmatpush1.msra.mxu0 %v385
  %1667 = vmatprep.subr.mxu0 0.0
  %1668 = vmatpush1.msra.mxu0 %v388
  %1669 = vmatprep.subr.mxu0 0.0
  %1670 = vmatpush1.msra.mxu0 %v391
  %1671 = vmatprep.subr.mxu0 0.0
  %1672 = vmatpush1.msra.mxu0 %v394
  %1673 = vmatprep.subr.mxu0 0.0
  %1674 = vmatpush1.msra.mxu0 %v397
  %1675 = vmatprep.subr.mxu0 0.0
  %1676 = vmatpush1.msra.mxu0 %v400
  %1677 = vmatprep.subr.mxu0 0.0
  %1678 = vmatpush1.msra.mxu0 %v403
  %1679 = vmatprep.subr.mxu0 0.0
  %1680 = vmatpush1.msra.mxu0 0.0
  %1681 = vmatprep.subr.mxu0 0.0
  %1682 = vmatpush1.msra.mxu0 0.0
  %1683 = vmatprep.subr.mxu0 0.0
  %1684 = vmatpush1.msra.mxu0 0.0
  %1685 = vmatprep.subr.mxu0 0.0
  %1686 = vmatpush1.msra.mxu0 0.0
  %1687 = vmatprep.subr.mxu0 0.0
  %1688 = vmatpush1.msra.mxu0 0.0
  %1689 = vmatprep.subr.mxu0 0.0
  %1690 = vmatpush1.msra.mxu0 0.0
  %1691 = vmatprep.subr.mxu0 0.0
  %1692 = vmatpush1.msra.mxu0 0.0
  %1693 = vmatprep.subr.mxu0 0.0
  %1694 = vmatpush1.msra.mxu0 0.0
  %1695 = vmatprep.subr.mxu0 0.0
  %1696 = vmatpush1.msra.mxu0 0.0
  %1697 = vmatprep.subr.mxu0 0.0
  %1698 = vmatpush1.msra.mxu0 0.0
  %1699 = vmatprep.subr.mxu0 0.0
  %1700 = vmatpush1.msra.mxu0 0.0
  %1701 = vmatprep.subr.mxu0 0.0
  %1702 = vmatpush1.msra.mxu0 0.0
  %1703 = vmatprep.subr.mxu0 0.0
  %1704 = vmatpush1.msra.mxu0 0.0
  %1705 = vmatprep.subr.mxu0 0.0
  %1706 = vmatpush1.msra.mxu0 0.0
  %1707 = vmatprep.subr.mxu0 0.0
  %1708 = vmatpush1.msra.mxu0 0.0
  %1709 = vmatprep.subr.mxu0 0.0
  %1710 = vmatpush1.msra.mxu0 0.0
  %1711 = vmatprep.mubr.f32.mxu0 0.0
  %1712 = vmatmul.mubr.f32.gmra.mrb[0].mxu0 %v1572
  %v1713 = vpop.f32.mrb[0].mxu0
  %v1714 = vadd.f32 %v417, %v1713
  %v1715 = vpop.f32.mrb[0].mxu0
  %1716 = vdwg.mxu0
  %v1717 = vadd.f32 %v1573, %v1643
  %v1718 = vxor.u32 %v1717, 2147483648
  %v1719 = vmul.f32 %v1718, 1.442695
  %v1720 = vpow.pop %v1719
  %v1721 = vadd.f32 %v1720, 1.0
  %v1722 = vrcp.pop %v1721
  %v1723 = vmul.f32 1.0, %v1722
  %v1724 = vadd.f32 %v1574, %v1645
  %v1725 = vxor.u32 %v1724, 2147483648
  %v1726 = vmul.f32 %v1725, 1.442695
  %v1727 = vpow.pop %v1726
  %v1728 = vadd.f32 %v1727, 1.0
  %v1729 = vrcp.pop %v1728
  %v1730 = vmul.f32 1.0, %v1729
  %v1731 = vmul.f32 %v1723, %v1714
  %v1732 = vadd.f32 %v1575, %v1731
  %v1733 = vtanh.pop %v1732
  %v1734 = vsub.f32 1.0, %v1730
  %v1735 = vmul.f32 %v1734, %v1733
  %v1736 = vmul.f32 %v1730, %v1572
  %v1737 = vadd.f32 %v1735, %v1736
  %1738 = vst [vmem:[#allocation2] sm:$0xff] %v1737
  // Predicated region
  $region38: #{name_classifier_gru_forward.1} parent=0 // pred_check
    %p1739 = pneg %p31
  $region39: #{name_classifier_gru_forward.1} parent=0 // pred_check_branch
    %1741 = sbr.rel (%p1739) target = $region41
  $region40: #{name_classifier_gru_forward.1} parent=0 // pred_region
    %1742 = vst [vmem:[%s9] sm:$0xff] %v1737
    %v1743 = vld [vmem:[%s6] sm:$0xff]
    %v1744 = vld [vmem:[%s6 + $0x8] sm:$0xff]
    %v1745 = vld [vmem:[%s6 + $0x10] sm:$0xff]
    %v1746 = vld [vmem:[%s6 + $0x18] sm:$0xff]
    %v1747 = vld [vmem:[%s6 + $0x20] sm:$0xff]
    %v1748 = vld [vmem:[%s6 + $0x28] sm:$0xff]
    %v1749 = vld [vmem:[%s6 + $0x30] sm:$0xff]
    %v1750 = vld [vmem:[%s6 + $0x38] sm:$0xff]
    %v1751 = vld [vmem:[%s6 + $0x40] sm:$0xff]
    %v1752 = vld [vmem:[%s6 + $0x48] sm:$0xff]
    %v1753 = vld [vmem:[%s6 + $0x50] sm:$0xff]
    %v1754 = vld [vmem:[%s6 + $0x58] sm:$0xff]
    %v1755 = vld [vmem:[%s6 + $0x60] sm:$0xff]
    %v1756 = vld [vmem:[%s6 + $0x68] sm:$0xff]
    %v1757 = vld [vmem:[%s6 + $0x70] sm:$0xff]
    %v1758 = vld [vmem:[%s6 + $0x78] sm:$0xff]
    %v1759 = vld [vmem:[%s7] sm:$0x1]
    %v1761 = vlaneseq
    %v1762 = vshrl.u32 %v1761, 7
    %v1763 = vsub.s32 0, %v1762
    %v1764 = vrot.slane %v1759, %v1763
    %1766 = vmatprep.subr.mxu0 0.0
    %1767 = vmatpush1.msra.mxu0 %v1743
    %1768 = vmatprep.subr.mxu0 0.0
    %1769 = vmatpush1.msra.mxu0 %v1744
    %1770 = vmatprep.subr.mxu0 0.0
    %1771 = vmatpush1.msra.mxu0 %v1745
    %1772 = vmatprep.subr.mxu0 0.0
    %1773 = vmatpush1.msra.mxu0 %v1746
    %1774 = vmatprep.subr.mxu0 0.0
    %1775 = vmatpush1.msra.mxu0 %v1747
    %1776 = vmatprep.subr.mxu0 0.0
    %1777 = vmatpush1.msra.mxu0 %v1748
    %1778 = vmatprep.subr.mxu0 0.0
    %1779 = vmatpush1.msra.mxu0 %v1749
    %1780 = vmatprep.subr.mxu0 0.0
    %1781 = vmatpush1.msra.mxu0 %v1750
    %1782 = vmatprep.subr.mxu0 0.0
    %1783 = vmatpush1.msra.mxu0 %v1751
    %1784 = vmatprep.subr.mxu0 0.0
    %1785 = vmatpush1.msra.mxu0 %v1752
    %1786 = vmatprep.subr.mxu0 0.0
    %1787 = vmatpush1.msra.mxu0 %v1753
    %1788 = vmatprep.subr.mxu0 0.0
    %1789 = vmatpush1.msra.mxu0 %v1754
    %1790 = vmatprep.subr.mxu0 0.0
    %1791 = vmatpush1.msra.mxu0 %v1755
    %1792 = vmatprep.subr.mxu0 0.0
    %1793 = vmatpush1.msra.mxu0 %v1756
    %1794 = vmatprep.subr.mxu0 0.0
    %1795 = vmatpush1.msra.mxu0 %v1757
    %1796 = vmatprep.subr.mxu0 0.0
    %1797 = vmatpush1.msra.mxu0 %v1758
    %1798 = vmatprep.subr.mxu0 0.0
    %1799 = vmatpush1.msra.mxu0 0.0
    %1800 = vmatprep.subr.mxu0 0.0
    %1801 = vmatpush1.msra.mxu0 0.0
    %1802 = vmatprep.subr.mxu0 0.0
    %1803 = vmatpush1.msra.mxu0 0.0
    %1804 = vmatprep.subr.mxu0 0.0
    %1805 = vmatpush1.msra.mxu0 0.0
    %1806 = vmatprep.subr.mxu0 0.0
    %1807 = vmatpush1.msra.mxu0 0.0
    %1808 = vmatprep.subr.mxu0 0.0
    %1809 = vmatpush1.msra.mxu0 0.0
    %1810 = vmatprep.subr.mxu0 0.0
    %1811 = vmatpush1.msra.mxu0 0.0
    %1812 = vmatprep.subr.mxu0 0.0
    %1813 = vmatpush1.msra.mxu0 0.0
    %1814 = vmatprep.subr.mxu0 0.0
    %1815 = vmatpush1.msra.mxu0 0.0
    %1816 = vmatprep.subr.mxu0 0.0
    %1817 = vmatpush1.msra.mxu0 0.0
    %1818 = vmatprep.subr.mxu0 0.0
    %1819 = vmatpush1.msra.mxu0 0.0
    %1820 = vmatprep.subr.mxu0 0.0
    %1821 = vmatpush1.msra.mxu0 0.0
    %1822 = vmatprep.subr.mxu0 0.0
    %1823 = vmatpush1.msra.mxu0 0.0
    %1824 = vmatprep.subr.mxu0 0.0
    %1825 = vmatpush1.msra.mxu0 0.0
    %1826 = vmatprep.subr.mxu0 0.0
    %1827 = vmatpush1.msra.mxu0 0.0
    %1828 = vmatprep.subr.mxu0 0.0
    %1829 = vmatpush1.msra.mxu0 0.0
    %1830 = vmatprep.mubr.f32.mxu0 0.0
    %1831 = vmatmul.mubr.f32.gmra.mrb[0].mxu0 %v1737
    %v1832 = vpop.f32.mrb[0].mxu0
    %v1833 = vadd.f32 %v1764, %v1832
    %v1834 = vpop.f32.mrb[0].mxu0
    %1835 = vdwg.mxu0
    %1836 = vmax.xlane.f32.xlu0 %v1833
    %v1837 = vpop.xlane.xlu0 %1836
    %v1838 = vsub.f32 %v1833, %v1837
    %v1839 = vmul.f32 %v1838, 1.442695
    %v1840 = vpow.pop %v1839
    %1841 = vadd.xlane.f32.xlu0 %v1840
    %v1842 = vpop.xlane.xlu0 %1841
    %v1843 = vlog2.pop %v1842
    %v1844 = vmul.f32 %v1843, 0.6931472
    %v1845 = vsub.f32 %v1838, %v1844
    %1846 = vst [vmem:[%s8] sm:$0xff] %v1845
  $region41: #{name_classifier_gru_forward.1} parent=0 // pred_fallthru
    _
  // Predicated region
  $region42: #{name_classifier_gru_forward.1} parent=0 // pred_check
    _
  $region43: #{name_classifier_gru_forward.1} parent=0 // pred_check_branch
    %1848 = sbr.rel (0) target = $region45
  $region44: #{name_classifier_gru_forward.1} parent=0 // pred_region
    _
  $region45: #{name_classifier_gru_forward.1} parent=0 // pred_fallthru
    _
  // Predicated region
  $region46: #{name_classifier_gru_forward.1} parent=0 // pred_check
    _
  $region47: #{name_classifier_gru_forward.1} parent=0 // pred_check_branch
    %1850 = sbr.rel (0) target = $region49
  $region48: #{name_classifier_gru_forward.1} parent=0 // pred_region
    _
  $region49: #{name_classifier_gru_forward.1} parent=0 // pred_fallthru
    _
  // Predicated region
  $region50: #{name_classifier_gru_forward.1} parent=0 // pred_check
    _
  $region51: #{name_classifier_gru_forward.1} parent=0 // pred_check_branch
    %1852 = sbr.rel (0) target = $region53
  $region52: #{name_classifier_gru_forward.1} parent=0 // pred_region
    _
  $region53: #{name_classifier_gru_forward.1} parent=0 // pred_fallthru
    _
  // Predicated region
  $region54: #{name_classifier_gru_forward.1} parent=0 // pred_check
    _
  $region55: #{name_classifier_gru_forward.1} parent=0 // pred_check_branch
    %1854 = sbr.rel (0) target = $region57
  $region56: #{name_classifier_gru_forward.1} parent=0 // pred_region
    _
  $region57: #{name_classifier_gru_forward.1} parent=0 // pred_fallthru
    _

</llo_original>
